<compile_context>
chip_gen: v6e
topology: v6e:2x2x1
jax: 0.10.0
libtpu: 0.0.40
codegen_flags: <defaults>
</compile_context>

<pallas_src>
import jax
import jax.numpy as jnp
from jax.experimental import pallas as pl
from jax.experimental.pallas import tpu as pltpu

D_HIDDEN = 512
D_OUT = 4
NOUT_PAD = 128          # lane-dense fc / output width
LANE = 128
SUBLANE = 8
MAX_TB = 256            # batch rows per grid step
NEG_BIG = -1e30         # bias for padded logit columns -> exp() == 0 in softmax


def _round_up(x, m):
    return (x + m - 1) // m * m


def policy_kernel(feat_ref, wc_ref, bc_ref, wf_ref, bf_ref, out_ref):
    # feat: [TB, D_pad] bf16     wc: [D_pad, 512] bf16   bc: [1, 512] f32
    # wf:   [512, 128]  bf16 (cols >= 4 are zero)
    # bf:   [1, 128]    f32  (cols >= 4 are -1e30)       out: [TB, 128] f32
    feat = feat_ref[...]

    # common_network stand-in: Linear + ReLU (MXU matmul, f32 accumulate).
    h = jnp.dot(feat, wc_ref[...], preferred_element_type=jnp.float32) + bc_ref[...]
    h = jnp.maximum(h, 0.0)

    # fc = nn.Linear(512, 4), padded to 128 output lanes.
    logits = jnp.dot(h.astype(jnp.bfloat16), wf_ref[...],
                     preferred_element_type=jnp.float32) + bf_ref[...]

    # nn.Softmax(dim=1); padded columns carry -1e30 so they contribute 0.
    m = jnp.max(logits, axis=-1, keepdims=True)
    e = jnp.exp(logits - m)
    denom = jnp.sum(e, axis=-1, keepdims=True)
    out_ref[...] = (e * pl.reciprocal(denom, approx=True)).astype(out_ref.dtype)


def prepare_params(params, d_in):
    """One-time pad/cast: K -> multiple of 128, fc width 4 -> 128, weights bf16."""
    wc, bc, wf, bf = params
    d_pad = _round_up(d_in, LANE)
    wc_p = (jnp.zeros((d_pad, D_HIDDEN), jnp.float32)
            .at[:d_in].set(wc).astype(jnp.bfloat16))
    wf_p = (jnp.zeros((D_HIDDEN, NOUT_PAD), jnp.float32)
            .at[:, :D_OUT].set(wf).astype(jnp.bfloat16))
    bf_p = (jnp.full((1, NOUT_PAD), NEG_BIG, jnp.float32)
            .at[:, :D_OUT].set(bf))
    return wc_p, bc.astype(jnp.float32), wf_p, bf_p


@jax.jit
def policy_network_forward(obs, dis, pos, prepared):
    """obs [B,C,H,W] (NCHW), dis [B,Dd], pos [B,Dp] -> softmax probs [B, 4]."""
    wc, bc, wf, bf = prepared
    d_pad = wc.shape[0]
    B = obs.shape[0]

    feat = jnp.concatenate(
        [obs.reshape(B, -1), dis.reshape(B, -1), pos.reshape(B, -1)], axis=1
    ).astype(jnp.float32)
    d_in = feat.shape[1]

    # Pad batch to a sublane-aligned tile and K to the padded weight width.
    tb = min(MAX_TB, _round_up(B, SUBLANE))
    b_pad = _round_up(B, tb)
    feat = jnp.pad(feat, ((0, b_pad - B), (0, d_pad - d_in))).astype(jnp.bfloat16)

    out = pl.pallas_call(
        policy_kernel,
        out_shape=jax.ShapeDtypeStruct((b_pad, NOUT_PAD), jnp.float32),
        grid=(b_pad // tb,),
        in_specs=[
            pl.BlockSpec((tb, d_pad), lambda i: (i, 0)),            # feat: batch-tiled
            pl.BlockSpec((d_pad, D_HIDDEN), lambda i: (0, 0)),      # wc: VMEM-resident
            pl.BlockSpec((1, D_HIDDEN), lambda i: (0, 0)),          # bc: resident
            pl.BlockSpec((D_HIDDEN, NOUT_PAD), lambda i: (0, 0)),   # wf: resident
            pl.BlockSpec((1, NOUT_PAD), lambda i: (0, 0)),          # bf: resident
        ],
        out_specs=pl.BlockSpec((tb, NOUT_PAD), lambda i: (i, 0)),
        compiler_params=pltpu.CompilerParams(
            dimension_semantics=("parallel",)),                     # v7x: 2 TCs
    )(feat, wc, bc, wf, bf)

    return out[:B, :D_OUT]


def policy_reference(obs, dis, pos, params):
    """Pure-JAX f32 reference of the same forward pass (for a loose check)."""
    wc, bc, wf, bf = params
    B = obs.shape[0]
    feat = jnp.concatenate(
        [obs.reshape(B, -1), dis.reshape(B, -1), pos.reshape(B, -1)], axis=1
    ).astype(jnp.float32)
    h = jnp.maximum(feat @ wc + bc, 0.0)
    return jax.nn.softmax(h @ wf + bf, axis=1)


def init_params(key, d_in, d_hidden=D_HIDDEN, d_out=D_OUT):
    """PyTorch-style uniform(-1/sqrt(fan_in), 1/sqrt(fan_in)) init, deterministic."""
    k1, k2, k3, k4 = jax.random.split(key, 4)
    lim_c = 1.0 / jnp.sqrt(jnp.float32(d_in))
    lim_f = 1.0 / jnp.sqrt(jnp.float32(d_hidden))
    wc = jax.random.uniform(k1, (d_in, d_hidden), jnp.float32, -lim_c, lim_c)
    bc = jax.random.uniform(k2, (1, d_hidden), jnp.float32, -lim_c, lim_c)
    wf = jax.random.uniform(k3, (d_hidden, d_out), jnp.float32, -lim_f, lim_f)
    bf = jax.random.uniform(k4, (1, d_out), jnp.float32, -lim_f, lim_f)
    return wc, bc, wf, bf


if __name__ == "__main__":
    key = jax.random.PRNGKey(0)
    k_obs, k_dis, k_pos, k_par = jax.random.split(key, 4)

    # Small, module-consistent shapes.
    B, C, H, W = 2, 4, 16, 16          # obs: NCHW
    Dd, Dp = 8, 2                      # auxiliary distance / position features
    d_in = C * H * W + Dd + Dp         # 1024 + 8 + 2 = 1034 -> common net -> 512

    obs = jax.random.normal(k_obs, (B, C, H, W), jnp.float32)
    dis = jax.random.normal(k_dis, (B, Dd), jnp.float32)
    pos = jax.random.normal(k_pos, (B, Dp), jnp.float32)

    # TODO(synk): the PyTorch `common_network` is unspecified; Linear+ReLU stand-in.
    params = init_params(k_par, d_in)
    prepared = prepare_params(params, d_in)     # bf16 / padded, done once

    probs = policy_network_forward(obs, dis, pos, prepared)
    probs = jax.block_until_ready(probs)

    assert probs.shape == (B, 4)
    # Softmax rows must sum to ~1 (loose: bf16 matmuls + approx reciprocal).
    assert bool(jnp.allclose(jnp.sum(probs, axis=1), 1.0, atol=2e-2))
    # Loose match against the f32 pure-JAX reference.
    ref = policy_reference(obs, dis, pos, params)
    assert bool(jnp.allclose(probs, ref, atol=3e-2))

    print("KERNEL_OK")
</pallas_src>

<mosaic_0001>
module attributes {stable_mosaic.version = 11 : i64} {
  func.func @policy_kernel(%arg0: i32, %arg1: memref<8x1152xbf16, #tpu.memory_space<vmem>>, %arg2: memref<1152x512xbf16, #tpu.memory_space<vmem>>, %arg3: memref<1x512xf32, #tpu.memory_space<vmem>>, %arg4: memref<512x128xbf16, #tpu.memory_space<vmem>>, %arg5: memref<1x128xf32, #tpu.memory_space<vmem>>, %arg6: memref<8x128xf32, #tpu.memory_space<vmem>>) attributes {dimension_semantics = [#tpu.dimension_semantics<parallel>], iteration_bounds = array<i64: 1>, scalar_prefetch = 0 : i64, scratch_operands = 0 : i64, tpu.core_type = #tpu.core_type<tc>, window_params = [{transform_indices = @transform_0, window_bounds = array<i64: 8, 1152>}, {pipeline_mode = #tpu.pipeline_mode<synchronous>, transform_indices = @transform_1, window_bounds = array<i64: 1152, 512>}, {pipeline_mode = #tpu.pipeline_mode<synchronous>, transform_indices = @transform_2, window_bounds = array<i64: 1, 512>}, {pipeline_mode = #tpu.pipeline_mode<synchronous>, transform_indices = @transform_3, window_bounds = array<i64: 512, 128>}, {pipeline_mode = #tpu.pipeline_mode<synchronous>, transform_indices = @transform_4, window_bounds = array<i64: 1, 128>}, {transform_indices = @transform_5, window_bounds = array<i64: 8, 128>}]} {
    %c0 = arith.constant 0 : index
    %c0_0 = arith.constant 0 : index
    %0 = vector.load %arg1[%c0, %c0_0] : memref<8x1152xbf16, #tpu.memory_space<vmem>>, vector<8x1152xbf16>
    %c0_1 = arith.constant 0 : index
    %c0_2 = arith.constant 0 : index
    %1 = vector.load %arg2[%c0_1, %c0_2] : memref<1152x512xbf16, #tpu.memory_space<vmem>>, vector<1152x512xbf16>
    %cst = arith.constant dense<0.000000e+00> : vector<8x512xf32>
    %2 = tpu.matmul %0, %1, %cst {dimension_numbers = #tpu.dot_dimension_numbers<[1], [0], [0], [1], [0, 0, 1, 1], [], []>} : vector<8x1152xbf16>, vector<1152x512xbf16>, vector<8x512xf32> -> vector<8x512xf32>
    %c0_3 = arith.constant 0 : index
    %c0_4 = arith.constant 0 : index
    %3 = vector.load %arg3[%c0_3, %c0_4] : memref<1x512xf32, #tpu.memory_space<vmem>>, vector<1x512xf32>
    %4 = vector.broadcast %3 : vector<1x512xf32> to vector<8x512xf32>
    %5 = arith.addf %2, %4 : vector<8x512xf32>
    %cst_5 = arith.constant 0.000000e+00 : f32
    %6 = vector.broadcast %cst_5 : f32 to vector<8x512xf32>
    %7 = arith.maximumf %5, %6 : vector<8x512xf32>
    %8 = arith.truncf %7 : vector<8x512xf32> to vector<8x512xbf16>
    %c0_6 = arith.constant 0 : index
    %c0_7 = arith.constant 0 : index
    %9 = vector.load %arg4[%c0_6, %c0_7] : memref<512x128xbf16, #tpu.memory_space<vmem>>, vector<512x128xbf16>
    %cst_8 = arith.constant dense<0.000000e+00> : vector<8x128xf32>
    %10 = tpu.matmul %8, %9, %cst_8 {dimension_numbers = #tpu.dot_dimension_numbers<[1], [0], [0], [1], [0, 0, 1, 1], [], []>} : vector<8x512xbf16>, vector<512x128xbf16>, vector<8x128xf32> -> vector<8x128xf32>
    %c0_9 = arith.constant 0 : index
    %c0_10 = arith.constant 0 : index
    %11 = vector.load %arg5[%c0_9, %c0_10] : memref<1x128xf32, #tpu.memory_space<vmem>>, vector<1x128xf32>
    %12 = vector.broadcast %11 : vector<1x128xf32> to vector<8x128xf32>
    %13 = arith.addf %10, %12 : vector<8x128xf32>
    %cst_11 = arith.constant dense<0xFF800000> : vector<8xf32>
    %14 = vector.multi_reduction <maximumf>, %13, %cst_11 [1] : vector<8x128xf32> to vector<8xf32>
    %15 = vector.shape_cast %14 : vector<8xf32> to vector<8x1xf32>
    %16 = vector.broadcast %15 : vector<8x1xf32> to vector<8x128xf32>
    %17 = arith.subf %13, %16 : vector<8x128xf32>
    %18 = math.exp %17 : vector<8x128xf32>
    %cst_12 = arith.constant dense<0.000000e+00> : vector<8xf32>
    %19 = vector.multi_reduction <add>, %18, %cst_12 [1] : vector<8x128xf32> to vector<8xf32>
    %20 = vector.shape_cast %19 : vector<8xf32> to vector<8x1xf32>
    %21 = tpu.reciprocal %20 {approx = true} : vector<8x1xf32> -> vector<8x1xf32>
    %22 = vector.broadcast %21 : vector<8x1xf32> to vector<8x128xf32>
    %23 = arith.mulf %18, %22 : vector<8x128xf32>
    %c0_13 = arith.constant 0 : index
    %c0_14 = arith.constant 0 : index
    %24 = vector.load %arg6[%c0_13, %c0_14] : memref<8x128xf32, #tpu.memory_space<vmem>>, vector<8x128xf32>
    tpu.vector_store %arg6[%c0_13, %c0_14], %23 {strides = array<i32>} : memref<8x128xf32, #tpu.memory_space<vmem>>, vector<8x128xf32>,
    return
  }
  func.func @transform_0(%arg0: i32) -> (i32, i32) {
    %c0_i32 = arith.constant 0 : i32
    %c0_i32_0 = arith.constant 0 : i32
    return %arg0, %c0_i32 : i32, i32
  }
  func.func @transform_1(%arg0: i32) -> (i32, i32) {
    %c0_i32 = arith.constant 0 : i32
    %c0_i32_0 = arith.constant 0 : i32
    %c0_i32_1 = arith.constant 0 : i32
    return %c0_i32, %c0_i32_0 : i32, i32
  }
  func.func @transform_2(%arg0: i32) -> (i32, i32) {
    %c0_i32 = arith.constant 0 : i32
    %c0_i32_0 = arith.constant 0 : i32
    %c0_i32_1 = arith.constant 0 : i32
    return %c0_i32, %c0_i32_0 : i32, i32
  }
  func.func @transform_3(%arg0: i32) -> (i32, i32) {
    %c0_i32 = arith.constant 0 : i32
    %c0_i32_0 = arith.constant 0 : i32
    %c0_i32_1 = arith.constant 0 : i32
    return %c0_i32, %c0_i32_0 : i32, i32
  }
  func.func @transform_4(%arg0: i32) -> (i32, i32) {
    %c0_i32 = arith.constant 0 : i32
    %c0_i32_0 = arith.constant 0 : i32
    %c0_i32_1 = arith.constant 0 : i32
    return %c0_i32, %c0_i32_0 : i32, i32
  }
  func.func @transform_5(%arg0: i32) -> (i32, i32) {
    %c0_i32 = arith.constant 0 : i32
    %c0_i32_0 = arith.constant 0 : i32
    return %arg0, %c0_i32 : i32, i32
  }
}

</mosaic_0001>

<llo_original>
// kernel: policy_network_forward.1
$region0: #{policy_network_forward.1}
  #allocation0 [shape = 'u32[]', space=smem, size = 0x4, offset = 0x4, fixed_abs, tag = 'smem constant byte address 0x4 - core index']
  #allocation1 [shape = 'u32[144,128]{1,0:T(1,128)}', space=vmem, size = 0x12000, scoped, tag = 'internal scratch']
  %s0 = inlined_call_operand.vmem [shape: bf16[8,1152], index: 0, kind: input, shape index: {}]
  %s1 = inlined_call_operand.hbm [shape: bf16[1152,512], index: 1, kind: input, shape index: {}]
  %s2 = inlined_call_operand.hbm [shape: f32[1,512], index: 2, kind: input, shape index: {}]
  %s3 = inlined_call_operand.hbm [shape: bf16[512,128], index: 3, kind: input, shape index: {}]
  %s4 = inlined_call_operand.hbm [shape: f32[1,128], index: 4, kind: input, shape index: {}]
  %s5 = inlined_call_operand.vmem [shape: f32[8,128], index: 5, kind: output, shape index: {}]
  %s6 = sld [smem:[#allocation0]]
  $region46: #{policy_network_forward.1} parent=0
    _
  %s8 = ssub.s32 1, %s6
  %s9 = scalar_select 0, %s8, %s6
  $region1: #{policy_network_forward.1} parent=0
    #allocation2 [shape = 'u8[1179648]{0}', space=vmem, size = 0x120000, scoped, tag = 'input window, operand 1, single buffered']
    #allocation3 [shape = 's32[1]{0}', space=sflag, size = 0x4, scoped, tag = 'scoped memory for policy_network_forward.1']
    #allocation4 [shape = 'u8[2048]{0}', space=vmem, size = 0x800, scoped, tag = 'input window, operand 2, single buffered']
    #allocation5 [shape = 's32[1]{0}', space=sflag, size = 0x4, scoped, tag = 'scoped memory for policy_network_forward.1']
    #allocation6 [shape = 'u8[131072]{0}', space=vmem, size = 0x20000, scoped, tag = 'input window, operand 3, single buffered']
    #allocation7 [shape = 'u8[512]{0}', space=vmem, size = 0x400, scoped, tag = 'input window, operand 4, single buffered']
    #allocation8 [shape = 's32[1]{0}', space=sflag, size = 0x4, scoped, tag = 'scoped memory for policy_network_forward.1']
    %10 = vsyncpa [#allocation3], 0
    %11 = vsyncpa [#allocation5], 0
    %12 = vsyncpa [#allocation8], 0
    // Predicated region
    $region2: #{policy_network_forward.1} parent=1 // pred_check
      _
    $region3: #{policy_network_forward.1} parent=1 // pred_check_branch
      %14 = sbr.rel (0) target = $region5
    $region4: #{policy_network_forward.1} parent=1 // pred_region
      _
    $region5: #{policy_network_forward.1} parent=1 // pred_fallthru
      _
    // Predicated region
    $region6: #{policy_network_forward.1} parent=1 // pred_check
      _
    $region7: #{policy_network_forward.1} parent=1 // pred_check_branch
      %16 = sbr.rel (0) target = $region9
    $region8: #{policy_network_forward.1} parent=1 // pred_region
      %s18 = ssub.s32 36864, 36864
      %19 = vsyncadd [#allocation3], %s18
      %s20 = sshll.u32 [#allocation2], 4
      %s21 = int_to_ptr.vmem [resolvable:$true] %s20
      %26 = dma.hbm_to_vmem [thread:$0]  %s1, 36864, %s21, [#allocation3], 256, 256, 16
    $region9: #{policy_network_forward.1} parent=1 // pred_fallthru
      _
    // Predicated region
    $region10: #{policy_network_forward.1} parent=1 // pred_check
      _
    $region11: #{policy_network_forward.1} parent=1 // pred_check_branch
      %28 = sbr.rel (0) target = $region13
    $region12: #{policy_network_forward.1} parent=1 // pred_region
      %s30 = ssub.s32 64, 64
      %31 = vsyncadd [#allocation5], %s30
      %s33 = sshll.u32 [#allocation4], 4
      %s34 = int_to_ptr.vmem [resolvable:$true] %s33
      %36 = dma.hbm_to_vmem [thread:$0]  %s2, 64, %s34, [#allocation5]
    $region13: #{policy_network_forward.1} parent=1 // pred_fallthru
      _
    // Predicated region
    $region14: #{policy_network_forward.1} parent=1 // pred_check
      _
    $region15: #{policy_network_forward.1} parent=1 // pred_check_branch
      %38 = sbr.rel (0) target = $region17
    $region16: #{policy_network_forward.1} parent=1 // pred_region
      %s40 = ssub.s32 4096, 4096
      %41 = vsyncadd [#allocation5], %s40
      %s42 = sshll.u32 [#allocation6], 4
      %s43 = int_to_ptr.vmem [resolvable:$true] %s42
      %48 = dma.hbm_to_vmem [thread:$0]  %s3, 4096, %s43, [#allocation5], 64, 64, 4
    $region17: #{policy_network_forward.1} parent=1 // pred_fallthru
      _
    // Predicated region
    $region18: #{policy_network_forward.1} parent=1 // pred_check
      _
    $region19: #{policy_network_forward.1} parent=1 // pred_check_branch
      %50 = sbr.rel (0) target = $region21
    $region20: #{policy_network_forward.1} parent=1 // pred_region
      %s52 = ssub.s32 16, 16
      %53 = vsyncadd [#allocation8], %s52
      %s55 = sshll.u32 [#allocation7], 4
      %s56 = int_to_ptr.vmem [resolvable:$true] %s55
      %58 = dma.hbm_to_vmem [thread:$0]  %s4, 16, %s56, [#allocation8]
    $region21: #{policy_network_forward.1} parent=1 // pred_fallthru
      _
    // Predicated region
    $region22: #{policy_network_forward.1} parent=1 // pred_check
      _
    $region23: #{policy_network_forward.1} parent=1 // pred_check_branch
      %60 = sbr.rel (0) target = $region25
    $region24: #{policy_network_forward.1} parent=1 // pred_region
      %61 = dma.done [#allocation3], 36864
    $region25: #{policy_network_forward.1} parent=1 // pred_fallthru
      _
    // Predicated region
    $region26: #{policy_network_forward.1} parent=1 // pred_check
      _
    $region27: #{policy_network_forward.1} parent=1 // pred_check_branch
      %63 = sbr.rel (0) target = $region29
    $region28: #{policy_network_forward.1} parent=1 // pred_region
      %64 = dma.done [#allocation5], 64
    $region29: #{policy_network_forward.1} parent=1 // pred_fallthru
      _
    // Predicated region
    $region30: #{policy_network_forward.1} parent=1 // pred_check
      _
    $region31: #{policy_network_forward.1} parent=1 // pred_check_branch
      %66 = sbr.rel (0) target = $region33
    $region32: #{policy_network_forward.1} parent=1 // pred_region
      %67 = dma.done [#allocation5], 4096
    $region33: #{policy_network_forward.1} parent=1 // pred_fallthru
      _
    // Predicated region
    $region34: #{policy_network_forward.1} parent=1 // pred_check
      _
    $region35: #{policy_network_forward.1} parent=1 // pred_check_branch
      %69 = sbr.rel (0) target = $region37
    $region36: #{policy_network_forward.1} parent=1 // pred_region
      %70 = dma.done [#allocation8], 16
    $region37: #{policy_network_forward.1} parent=1 // pred_fallthru
      _
    %v72 = vld [vmem:[%s0] sm:$0xff]
    %v73 = vld [vmem:[%s0 + $0x8] sm:$0xff]
    %v74 = vld [vmem:[%s0 + $0x10] sm:$0xff]
    %v75 = vld [vmem:[%s0 + $0x18] sm:$0xff]
    %v76 = vld [vmem:[%s0 + $0x20] sm:$0xf]
    %v77 = vld [vmem:[#allocation2] sm:$0xff]
    %v78 = vld [vmem:[#allocation2 + $0x8] sm:$0xff]
    %v79 = vld [vmem:[#allocation2 + $0x10] sm:$0xff]
    %v80 = vld [vmem:[#allocation2 + $0x18] sm:$0xff]
    %v81 = vld [vmem:[#allocation2 + $0x20] sm:$0xff]
    %v82 = vld [vmem:[#allocation2 + $0x28] sm:$0xff]
    %v83 = vld [vmem:[#allocation2 + $0x30] sm:$0xff]
    %v84 = vld [vmem:[#allocation2 + $0x38] sm:$0xff]
    %v85 = vld [vmem:[#allocation2 + $0x40] sm:$0xff]
    %v86 = vld [vmem:[#allocation2 + $0x48] sm:$0xff]
    %v87 = vld [vmem:[#allocation2 + $0x50] sm:$0xff]
    %v88 = vld [vmem:[#allocation2 + $0x58] sm:$0xff]
    %v89 = vld [vmem:[#allocation2 + $0x60] sm:$0xff]
    %v90 = vld [vmem:[#allocation2 + $0x68] sm:$0xff]
    %v91 = vld [vmem:[#allocation2 + $0x70] sm:$0xff]
    %v92 = vld [vmem:[#allocation2 + $0x78] sm:$0xff]
    %v93 = vld [vmem:[#allocation2 + $0x80] sm:$0xff]
    %v94 = vld [vmem:[#allocation2 + $0x88] sm:$0xff]
    %v95 = vld [vmem:[#allocation2 + $0x90] sm:$0xff]
    %v96 = vld [vmem:[#allocation2 + $0x98] sm:$0xff]
    %v97 = vld [vmem:[#allocation2 + $0xa0] sm:$0xff]
    %v98 = vld [vmem:[#allocation2 + $0xa8] sm:$0xff]
    %v99 = vld [vmem:[#allocation2 + $0xb0] sm:$0xff]
    %v100 = vld [vmem:[#allocation2 + $0xb8] sm:$0xff]
    %v101 = vld [vmem:[#allocation2 + $0xc0] sm:$0xff]
    %v102 = vld [vmem:[#allocation2 + $0xc8] sm:$0xff]
    %v103 = vld [vmem:[#allocation2 + $0xd0] sm:$0xff]
    %v104 = vld [vmem:[#allocation2 + $0xd8] sm:$0xff]
    %v105 = vld [vmem:[#allocation2 + $0xe0] sm:$0xff]
    %v106 = vld [vmem:[#allocation2 + $0xe8] sm:$0xff]
    %v107 = vld [vmem:[#allocation2 + $0xf0] sm:$0xff]
    %v108 = vld [vmem:[#allocation2 + $0xf8] sm:$0xff]
    %v109 = vld [vmem:[#allocation2 + $0x100] sm:$0xff]
    %v110 = vld [vmem:[#allocation2 + $0x108] sm:$0xff]
    %v111 = vld [vmem:[#allocation2 + $0x110] sm:$0xff]
    %v112 = vld [vmem:[#allocation2 + $0x118] sm:$0xff]
    %v113 = vld [vmem:[#allocation2 + $0x120] sm:$0xff]
    %v114 = vld [vmem:[#allocation2 + $0x128] sm:$0xff]
    %v115 = vld [vmem:[#allocation2 + $0x130] sm:$0xff]
    %v116 = vld [vmem:[#allocation2 + $0x138] sm:$0xff]
    %v117 = vld [vmem:[#allocation2 + $0x140] sm:$0xff]
    %v118 = vld [vmem:[#allocation2 + $0x148] sm:$0xff]
    %v119 = vld [vmem:[#allocation2 + $0x150] sm:$0xff]
    %v120 = vld [vmem:[#allocation2 + $0x158] sm:$0xff]
    %v121 = vld [vmem:[#allocation2 + $0x160] sm:$0xff]
    %v122 = vld [vmem:[#allocation2 + $0x168] sm:$0xff]
    %v123 = vld [vmem:[#allocation2 + $0x170] sm:$0xff]
    %v124 = vld [vmem:[#allocation2 + $0x178] sm:$0xff]
    %v125 = vld [vmem:[#allocation2 + $0x180] sm:$0xff]
    %v126 = vld [vmem:[#allocation2 + $0x188] sm:$0xff]
    %v127 = vld [vmem:[#allocation2 + $0x190] sm:$0xff]
    %v128 = vld [vmem:[#allocation2 + $0x198] sm:$0xff]
    %v129 = vld [vmem:[#allocation2 + $0x1a0] sm:$0xff]
    %v130 = vld [vmem:[#allocation2 + $0x1a8] sm:$0xff]
    %v131 = vld [vmem:[#allocation2 + $0x1b0] sm:$0xff]
    %v132 = vld [vmem:[#allocation2 + $0x1b8] sm:$0xff]
    %v133 = vld [vmem:[#allocation2 + $0x1c0] sm:$0xff]
    %v134 = vld [vmem:[#allocation2 + $0x1c8] sm:$0xff]
    %v135 = vld [vmem:[#allocation2 + $0x1d0] sm:$0xff]
    %v136 = vld [vmem:[#allocation2 + $0x1d8] sm:$0xff]
    %v137 = vld [vmem:[#allocation2 + $0x1e0] sm:$0xff]
    %v138 = vld [vmem:[#allocation2 + $0x1e8] sm:$0xff]
    %v139 = vld [vmem:[#allocation2 + $0x1f0] sm:$0xff]
    %v140 = vld [vmem:[#allocation2 + $0x1f8] sm:$0xff]
    %v141 = vld [vmem:[#allocation2 + $0x200] sm:$0xff]
    %v142 = vld [vmem:[#allocation2 + $0x208] sm:$0xff]
    %v143 = vld [vmem:[#allocation2 + $0x210] sm:$0xff]
    %v144 = vld [vmem:[#allocation2 + $0x218] sm:$0xff]
    %v145 = vld [vmem:[#allocation2 + $0x220] sm:$0xff]
    %v146 = vld [vmem:[#allocation2 + $0x228] sm:$0xff]
    %v147 = vld [vmem:[#allocation2 + $0x230] sm:$0xff]
    %v148 = vld [vmem:[#allocation2 + $0x238] sm:$0xff]
    %v149 = vld [vmem:[#allocation2 + $0x240] sm:$0xff]
    %v150 = vld [vmem:[#allocation2 + $0x248] sm:$0xff]
    %v151 = vld [vmem:[#allocation2 + $0x250] sm:$0xff]
    %v152 = vld [vmem:[#allocation2 + $0x258] sm:$0xff]
    %v153 = vld [vmem:[#allocation2 + $0x260] sm:$0xff]
    %v154 = vld [vmem:[#allocation2 + $0x268] sm:$0xff]
    %v155 = vld [vmem:[#allocation2 + $0x270] sm:$0xff]
    %v156 = vld [vmem:[#allocation2 + $0x278] sm:$0xff]
    %v157 = vld [vmem:[#allocation2 + $0x280] sm:$0xff]
    %v158 = vld [vmem:[#allocation2 + $0x288] sm:$0xff]
    %v159 = vld [vmem:[#allocation2 + $0x290] sm:$0xff]
    %v160 = vld [vmem:[#allocation2 + $0x298] sm:$0xff]
    %v161 = vld [vmem:[#allocation2 + $0x2a0] sm:$0xff]
    %v162 = vld [vmem:[#allocation2 + $0x2a8] sm:$0xff]
    %v163 = vld [vmem:[#allocation2 + $0x2b0] sm:$0xff]
    %v164 = vld [vmem:[#allocation2 + $0x2b8] sm:$0xff]
    %v165 = vld [vmem:[#allocation2 + $0x2c0] sm:$0xff]
    %v166 = vld [vmem:[#allocation2 + $0x2c8] sm:$0xff]
    %v167 = vld [vmem:[#allocation2 + $0x2d0] sm:$0xff]
    %v168 = vld [vmem:[#allocation2 + $0x2d8] sm:$0xff]
    %v169 = vld [vmem:[#allocation2 + $0x2e0] sm:$0xff]
    %v170 = vld [vmem:[#allocation2 + $0x2e8] sm:$0xff]
    %v171 = vld [vmem:[#allocation2 + $0x2f0] sm:$0xff]
    %v172 = vld [vmem:[#allocation2 + $0x2f8] sm:$0xff]
    %v173 = vld [vmem:[#allocation2 + $0x300] sm:$0xff]
    %v174 = vld [vmem:[#allocation2 + $0x308] sm:$0xff]
    %v175 = vld [vmem:[#allocation2 + $0x310] sm:$0xff]
    %v176 = vld [vmem:[#allocation2 + $0x318] sm:$0xff]
    %v177 = vld [vmem:[#allocation2 + $0x320] sm:$0xff]
    %v178 = vld [vmem:[#allocation2 + $0x328] sm:$0xff]
    %v179 = vld [vmem:[#allocation2 + $0x330] sm:$0xff]
    %v180 = vld [vmem:[#allocation2 + $0x338] sm:$0xff]
    %v181 = vld [vmem:[#allocation2 + $0x340] sm:$0xff]
    %v182 = vld [vmem:[#allocation2 + $0x348] sm:$0xff]
    %v183 = vld [vmem:[#allocation2 + $0x350] sm:$0xff]
    %v184 = vld [vmem:[#allocation2 + $0x358] sm:$0xff]
    %v185 = vld [vmem:[#allocation2 + $0x360] sm:$0xff]
    %v186 = vld [vmem:[#allocation2 + $0x368] sm:$0xff]
    %v187 = vld [vmem:[#allocation2 + $0x370] sm:$0xff]
    %v188 = vld [vmem:[#allocation2 + $0x378] sm:$0xff]
    %v189 = vld [vmem:[#allocation2 + $0x380] sm:$0xff]
    %v190 = vld [vmem:[#allocation2 + $0x388] sm:$0xff]
    %v191 = vld [vmem:[#allocation2 + $0x390] sm:$0xff]
    %v192 = vld [vmem:[#allocation2 + $0x398] sm:$0xff]
    %v193 = vld [vmem:[#allocation2 + $0x3a0] sm:$0xff]
    %v194 = vld [vmem:[#allocation2 + $0x3a8] sm:$0xff]
    %v195 = vld [vmem:[#allocation2 + $0x3b0] sm:$0xff]
    %v196 = vld [vmem:[#allocation2 + $0x3b8] sm:$0xff]
    %v197 = vld [vmem:[#allocation2 + $0x3c0] sm:$0xff]
    %v198 = vld [vmem:[#allocation2 + $0x3c8] sm:$0xff]
    %v199 = vld [vmem:[#allocation2 + $0x3d0] sm:$0xff]
    %v200 = vld [vmem:[#allocation2 + $0x3d8] sm:$0xff]
    %v201 = vld [vmem:[#allocation2 + $0x3e0] sm:$0xff]
    %v202 = vld [vmem:[#allocation2 + $0x3e8] sm:$0xff]
    %v203 = vld [vmem:[#allocation2 + $0x3f0] sm:$0xff]
    %v204 = vld [vmem:[#allocation2 + $0x3f8] sm:$0xff]
    %v205 = vld [vmem:[#allocation2 + $0x400] sm:$0xff]
    %v206 = vld [vmem:[#allocation2 + $0x408] sm:$0xff]
    %v207 = vld [vmem:[#allocation2 + $0x410] sm:$0xff]
    %v208 = vld [vmem:[#allocation2 + $0x418] sm:$0xff]
    %v209 = vld [vmem:[#allocation2 + $0x420] sm:$0xff]
    %v210 = vld [vmem:[#allocation2 + $0x428] sm:$0xff]
    %v211 = vld [vmem:[#allocation2 + $0x430] sm:$0xff]
    %v212 = vld [vmem:[#allocation2 + $0x438] sm:$0xff]
    %v213 = vld [vmem:[#allocation2 + $0x440] sm:$0xff]
    %v214 = vld [vmem:[#allocation2 + $0x448] sm:$0xff]
    %v215 = vld [vmem:[#allocation2 + $0x450] sm:$0xff]
    %v216 = vld [vmem:[#allocation2 + $0x458] sm:$0xff]
    %v217 = vld [vmem:[#allocation2 + $0x460] sm:$0xff]
    %v218 = vld [vmem:[#allocation2 + $0x468] sm:$0xff]
    %v219 = vld [vmem:[#allocation2 + $0x470] sm:$0xff]
    %v220 = vld [vmem:[#allocation2 + $0x478] sm:$0xff]
    %v221 = vld [vmem:[#allocation2 + $0x480] sm:$0xff]
    %v222 = vld [vmem:[#allocation2 + $0x488] sm:$0xff]
    %v223 = vld [vmem:[#allocation2 + $0x490] sm:$0xff]
    %v224 = vld [vmem:[#allocation2 + $0x498] sm:$0xff]
    %v225 = vld [vmem:[#allocation2 + $0x4a0] sm:$0xff]
    %v226 = vld [vmem:[#allocation2 + $0x4a8] sm:$0xff]
    %v227 = vld [vmem:[#allocation2 + $0x4b0] sm:$0xff]
    %v228 = vld [vmem:[#allocation2 + $0x4b8] sm:$0xff]
    %v229 = vld [vmem:[#allocation2 + $0x4c0] sm:$0xff]
    %v230 = vld [vmem:[#allocation2 + $0x4c8] sm:$0xff]
    %v231 = vld [vmem:[#allocation2 + $0x4d0] sm:$0xff]
    %v232 = vld [vmem:[#allocation2 + $0x4d8] sm:$0xff]
    %v233 = vld [vmem:[#allocation2 + $0x4e0] sm:$0xff]
    %v234 = vld [vmem:[#allocation2 + $0x4e8] sm:$0xff]
    %v235 = vld [vmem:[#allocation2 + $0x4f0] sm:$0xff]
    %v236 = vld [vmem:[#allocation2 + $0x4f8] sm:$0xff]
    %v237 = vld [vmem:[#allocation2 + $0x500] sm:$0xff]
    %v238 = vld [vmem:[#allocation2 + $0x508] sm:$0xff]
    %v239 = vld [vmem:[#allocation2 + $0x510] sm:$0xff]
    %v240 = vld [vmem:[#allocation2 + $0x518] sm:$0xff]
    %v241 = vld [vmem:[#allocation2 + $0x520] sm:$0xff]
    %v242 = vld [vmem:[#allocation2 + $0x528] sm:$0xff]
    %v243 = vld [vmem:[#allocation2 + $0x530] sm:$0xff]
    %v244 = vld [vmem:[#allocation2 + $0x538] sm:$0xff]
    %v245 = vld [vmem:[#allocation2 + $0x540] sm:$0xff]
    %v246 = vld [vmem:[#allocation2 + $0x548] sm:$0xff]
    %v247 = vld [vmem:[#allocation2 + $0x550] sm:$0xff]
    %v248 = vld [vmem:[#allocation2 + $0x558] sm:$0xff]
    %v249 = vld [vmem:[#allocation2 + $0x560] sm:$0xff]
    %v250 = vld [vmem:[#allocation2 + $0x568] sm:$0xff]
    %v251 = vld [vmem:[#allocation2 + $0x570] sm:$0xff]
    %v252 = vld [vmem:[#allocation2 + $0x578] sm:$0xff]
    %v253 = vld [vmem:[#allocation2 + $0x580] sm:$0xff]
    %v254 = vld [vmem:[#allocation2 + $0x588] sm:$0xff]
    %v255 = vld [vmem:[#allocation2 + $0x590] sm:$0xff]
    %v256 = vld [vmem:[#allocation2 + $0x598] sm:$0xff]
    %v257 = vld [vmem:[#allocation2 + $0x5a0] sm:$0xff]
    %v258 = vld [vmem:[#allocation2 + $0x5a8] sm:$0xff]
    %v259 = vld [vmem:[#allocation2 + $0x5b0] sm:$0xff]
    %v260 = vld [vmem:[#allocation2 + $0x5b8] sm:$0xff]
    %v261 = vld [vmem:[#allocation2 + $0x5c0] sm:$0xff]
    %v262 = vld [vmem:[#allocation2 + $0x5c8] sm:$0xff]
    %v263 = vld [vmem:[#allocation2 + $0x5d0] sm:$0xff]
    %v264 = vld [vmem:[#allocation2 + $0x5d8] sm:$0xff]
    %v265 = vld [vmem:[#allocation2 + $0x5e0] sm:$0xff]
    %v266 = vld [vmem:[#allocation2 + $0x5e8] sm:$0xff]
    %v267 = vld [vmem:[#allocation2 + $0x5f0] sm:$0xff]
    %v268 = vld [vmem:[#allocation2 + $0x5f8] sm:$0xff]
    %v269 = vld [vmem:[#allocation2 + $0x600] sm:$0xff]
    %v270 = vld [vmem:[#allocation2 + $0x608] sm:$0xff]
    %v271 = vld [vmem:[#allocation2 + $0x610] sm:$0xff]
    %v272 = vld [vmem:[#allocation2 + $0x618] sm:$0xff]
    %v273 = vld [vmem:[#allocation2 + $0x620] sm:$0xff]
    %v274 = vld [vmem:[#allocation2 + $0x628] sm:$0xff]
    %v275 = vld [vmem:[#allocation2 + $0x630] sm:$0xff]
    %v276 = vld [vmem:[#allocation2 + $0x638] sm:$0xff]
    %v277 = vld [vmem:[#allocation2 + $0x640] sm:$0xff]
    %v278 = vld [vmem:[#allocation2 + $0x648] sm:$0xff]
    %v279 = vld [vmem:[#allocation2 + $0x650] sm:$0xff]
    %v280 = vld [vmem:[#allocation2 + $0x658] sm:$0xff]
    %v281 = vld [vmem:[#allocation2 + $0x660] sm:$0xff]
    %v282 = vld [vmem:[#allocation2 + $0x668] sm:$0xff]
    %v283 = vld [vmem:[#allocation2 + $0x670] sm:$0xff]
    %v284 = vld [vmem:[#allocation2 + $0x678] sm:$0xff]
    %v285 = vld [vmem:[#allocation2 + $0x680] sm:$0xff]
    %v286 = vld [vmem:[#allocation2 + $0x688] sm:$0xff]
    %v287 = vld [vmem:[#allocation2 + $0x690] sm:$0xff]
    %v288 = vld [vmem:[#allocation2 + $0x698] sm:$0xff]
    %v289 = vld [vmem:[#allocation2 + $0x6a0] sm:$0xff]
    %v290 = vld [vmem:[#allocation2 + $0x6a8] sm:$0xff]
    %v291 = vld [vmem:[#allocation2 + $0x6b0] sm:$0xff]
    %v292 = vld [vmem:[#allocation2 + $0x6b8] sm:$0xff]
    %v293 = vld [vmem:[#allocation2 + $0x6c0] sm:$0xff]
    %v294 = vld [vmem:[#allocation2 + $0x6c8] sm:$0xff]
    %v295 = vld [vmem:[#allocation2 + $0x6d0] sm:$0xff]
    %v296 = vld [vmem:[#allocation2 + $0x6d8] sm:$0xff]
    %v297 = vld [vmem:[#allocation2 + $0x6e0] sm:$0xff]
    %v298 = vld [vmem:[#allocation2 + $0x6e8] sm:$0xff]
    %v299 = vld [vmem:[#allocation2 + $0x6f0] sm:$0xff]
    %v300 = vld [vmem:[#allocation2 + $0x6f8] sm:$0xff]
    %v301 = vld [vmem:[#allocation2 + $0x700] sm:$0xff]
    %v302 = vld [vmem:[#allocation2 + $0x708] sm:$0xff]
    %v303 = vld [vmem:[#allocation2 + $0x710] sm:$0xff]
    %v304 = vld [vmem:[#allocation2 + $0x718] sm:$0xff]
    %v305 = vld [vmem:[#allocation2 + $0x720] sm:$0xff]
    %v306 = vld [vmem:[#allocation2 + $0x728] sm:$0xff]
    %v307 = vld [vmem:[#allocation2 + $0x730] sm:$0xff]
    %v308 = vld [vmem:[#allocation2 + $0x738] sm:$0xff]
    %v309 = vld [vmem:[#allocation2 + $0x740] sm:$0xff]
    %v310 = vld [vmem:[#allocation2 + $0x748] sm:$0xff]
    %v311 = vld [vmem:[#allocation2 + $0x750] sm:$0xff]
    %v312 = vld [vmem:[#allocation2 + $0x758] sm:$0xff]
    %v313 = vld [vmem:[#allocation2 + $0x760] sm:$0xff]
    %v314 = vld [vmem:[#allocation2 + $0x768] sm:$0xff]
    %v315 = vld [vmem:[#allocation2 + $0x770] sm:$0xff]
    %v316 = vld [vmem:[#allocation2 + $0x778] sm:$0xff]
    %v317 = vld [vmem:[#allocation2 + $0x780] sm:$0xff]
    %v318 = vld [vmem:[#allocation2 + $0x788] sm:$0xff]
    %v319 = vld [vmem:[#allocation2 + $0x790] sm:$0xff]
    %v320 = vld [vmem:[#allocation2 + $0x798] sm:$0xff]
    %v321 = vld [vmem:[#allocation2 + $0x7a0] sm:$0xff]
    %v322 = vld [vmem:[#allocation2 + $0x7a8] sm:$0xff]
    %v323 = vld [vmem:[#allocation2 + $0x7b0] sm:$0xff]
    %v324 = vld [vmem:[#allocation2 + $0x7b8] sm:$0xff]
    %v325 = vld [vmem:[#allocation2 + $0x7c0] sm:$0xff]
    %v326 = vld [vmem:[#allocation2 + $0x7c8] sm:$0xff]
    %v327 = vld [vmem:[#allocation2 + $0x7d0] sm:$0xff]
    %v328 = vld [vmem:[#allocation2 + $0x7d8] sm:$0xff]
    %v329 = vld [vmem:[#allocation2 + $0x7e0] sm:$0xff]
    %v330 = vld [vmem:[#allocation2 + $0x7e8] sm:$0xff]
    %v331 = vld [vmem:[#allocation2 + $0x7f0] sm:$0xff]
    %v332 = vld [vmem:[#allocation2 + $0x7f8] sm:$0xff]
    %v333 = vld [vmem:[#allocation2 + $0x800] sm:$0xff]
    %v334 = vld [vmem:[#allocation2 + $0x808] sm:$0xff]
    %v335 = vld [vmem:[#allocation2 + $0x810] sm:$0xff]
    %v336 = vld [vmem:[#allocation2 + $0x818] sm:$0xff]
    %v337 = vld [vmem:[#allocation2 + $0x820] sm:$0xff]
    %v338 = vld [vmem:[#allocation2 + $0x828] sm:$0xff]
    %v339 = vld [vmem:[#allocation2 + $0x830] sm:$0xff]
    %v340 = vld [vmem:[#allocation2 + $0x838] sm:$0xff]
    %v341 = vld [vmem:[#allocation2 + $0x840] sm:$0xff]
    %v342 = vld [vmem:[#allocation2 + $0x848] sm:$0xff]
    %v343 = vld [vmem:[#allocation2 + $0x850] sm:$0xff]
    %v344 = vld [vmem:[#allocation2 + $0x858] sm:$0xff]
    %v345 = vld [vmem:[#allocation2 + $0x860] sm:$0xff]
    %v346 = vld [vmem:[#allocation2 + $0x868] sm:$0xff]
    %v347 = vld [vmem:[#allocation2 + $0x870] sm:$0xff]
    %v348 = vld [vmem:[#allocation2 + $0x878] sm:$0xff]
    %v349 = vld [vmem:[#allocation2 + $0x880] sm:$0xff]
    %v350 = vld [vmem:[#allocation2 + $0x888] sm:$0xff]
    %v351 = vld [vmem:[#allocation2 + $0x890] sm:$0xff]
    %v352 = vld [vmem:[#allocation2 + $0x898] sm:$0xff]
    %v353 = vld [vmem:[#allocation2 + $0x8a0] sm:$0xff]
    %v354 = vld [vmem:[#allocation2 + $0x8a8] sm:$0xff]
    %v355 = vld [vmem:[#allocation2 + $0x8b0] sm:$0xff]
    %v356 = vld [vmem:[#allocation2 + $0x8b8] sm:$0xff]
    %v357 = vld [vmem:[#allocation2 + $0x8c0] sm:$0xff]
    %v358 = vld [vmem:[#allocation2 + $0x8c8] sm:$0xff]
    %v359 = vld [vmem:[#allocation2 + $0x8d0] sm:$0xff]
    %v360 = vld [vmem:[#allocation2 + $0x8d8] sm:$0xff]
    %v361 = vld [vmem:[#allocation2 + $0x8e0] sm:$0xff]
    %v362 = vld [vmem:[#allocation2 + $0x8e8] sm:$0xff]
    %v363 = vld [vmem:[#allocation2 + $0x8f0] sm:$0xff]
    %v364 = vld [vmem:[#allocation2 + $0x8f8] sm:$0xff]
    %v365 = vld [vmem:[#allocation4] sm:$0xf]
    %v367 = vlaneseq
    %v368 = vshrl.u32 %v367, 7
    %v369 = vsub.s32 0, %v368
    %v370 = vrot.slane %v365, %v369
    %v371 = vlaneseq
    %v372 = vshrl.u32 %v371, 7
    %v373 = vsub.s32 1, %v372
    %v374 = vrot.slane %v365, %v373
    %v375 = vlaneseq
    %v376 = vshrl.u32 %v375, 7
    %v377 = vsub.s32 2, %v376
    %v378 = vrot.slane %v365, %v377
    %v379 = vlaneseq
    %v380 = vshrl.u32 %v379, 7
    %v381 = vsub.s32 3, %v380
    %v382 = vrot.slane %v365, %v381
    %v392 = vunpack.c.l.b16 %v72
    %v393 = vunpack.c.h.b16 %v72
    %v394 = vunpack.c.l.b16 %v73
    %v395 = vunpack.c.h.b16 %v73
    %v396 = vunpack.c.l.b16 %v74
    %v397 = vunpack.c.h.b16 %v74
    %v398 = vunpack.c.l.b16 %v75
    %v399 = vunpack.c.h.b16 %v75
    %v400 = vunpack.c.l.b16 %v76
    %v401 = vpack.c.b16 %v392, %v392
    %v402 = vpack.c.b16 %v393, %v393
    %v403 = vpack.c.b16 %v394, %v394
    %v404 = vpack.c.b16 %v395, %v395
    %v405 = vpack.c.b16 %v396, %v396
    %v406 = vpack.c.b16 %v397, %v397
    %v407 = vpack.c.b16 %v398, %v398
    %v408 = vpack.c.b16 %v399, %v399
    %v409 = vpack.c.b16 %v400, %v400
    %v707 = vunpack.c.l.b16 %v77
    %v708 = vunpack.c.h.b16 %v77
    %v709 = vunpack.c.l.b16 %v78
    %v710 = vunpack.c.h.b16 %v78
    %v711 = vunpack.c.l.b16 %v79
    %v712 = vunpack.c.h.b16 %v79
    %v713 = vunpack.c.l.b16 %v80
    %v714 = vunpack.c.h.b16 %v80
    %v715 = vunpack.c.l.b16 %v81
    %v716 = vunpack.c.h.b16 %v81
    %v717 = vunpack.c.l.b16 %v82
    %v718 = vunpack.c.h.b16 %v82
    %v719 = vunpack.c.l.b16 %v83
    %v720 = vunpack.c.h.b16 %v83
    %v721 = vunpack.c.l.b16 %v84
    %v722 = vunpack.c.h.b16 %v84
    %v723 = vunpack.c.l.b16 %v85
    %v724 = vunpack.c.h.b16 %v85
    %v725 = vunpack.c.l.b16 %v86
    %v726 = vunpack.c.h.b16 %v86
    %v727 = vunpack.c.l.b16 %v87
    %v728 = vunpack.c.h.b16 %v87
    %v729 = vunpack.c.l.b16 %v88
    %v730 = vunpack.c.h.b16 %v88
    %v731 = vunpack.c.l.b16 %v89
    %v732 = vunpack.c.h.b16 %v89
    %v733 = vunpack.c.l.b16 %v90
    %v734 = vunpack.c.h.b16 %v90
    %v735 = vunpack.c.l.b16 %v91
    %v736 = vunpack.c.h.b16 %v91
    %v737 = vunpack.c.l.b16 %v92
    %v738 = vunpack.c.h.b16 %v92
    %v739 = vunpack.c.l.b16 %v93
    %v740 = vunpack.c.h.b16 %v93
    %v741 = vunpack.c.l.b16 %v94
    %v742 = vunpack.c.h.b16 %v94
    %v743 = vunpack.c.l.b16 %v95
    %v744 = vunpack.c.h.b16 %v95
    %v745 = vunpack.c.l.b16 %v96
    %v746 = vunpack.c.h.b16 %v96
    %v747 = vunpack.c.l.b16 %v97
    %v748 = vunpack.c.h.b16 %v97
    %v749 = vunpack.c.l.b16 %v98
    %v750 = vunpack.c.h.b16 %v98
    %v751 = vunpack.c.l.b16 %v99
    %v752 = vunpack.c.h.b16 %v99
    %v753 = vunpack.c.l.b16 %v100
    %v754 = vunpack.c.h.b16 %v100
    %v755 = vunpack.c.l.b16 %v101
    %v756 = vunpack.c.h.b16 %v101
    %v757 = vunpack.c.l.b16 %v102
    %v758 = vunpack.c.h.b16 %v102
    %v759 = vunpack.c.l.b16 %v103
    %v760 = vunpack.c.h.b16 %v103
    %v761 = vunpack.c.l.b16 %v104
    %v762 = vunpack.c.h.b16 %v104
    %v763 = vunpack.c.l.b16 %v105
    %v764 = vunpack.c.h.b16 %v105
    %v765 = vunpack.c.l.b16 %v106
    %v766 = vunpack.c.h.b16 %v106
    %v767 = vunpack.c.l.b16 %v107
    %v768 = vunpack.c.h.b16 %v107
    %v769 = vunpack.c.l.b16 %v108
    %v770 = vunpack.c.h.b16 %v108
    %v771 = vunpack.c.l.b16 %v109
    %v772 = vunpack.c.h.b16 %v109
    %v773 = vunpack.c.l.b16 %v110
    %v774 = vunpack.c.h.b16 %v110
    %v775 = vunpack.c.l.b16 %v111
    %v776 = vunpack.c.h.b16 %v111
    %v777 = vunpack.c.l.b16 %v112
    %v778 = vunpack.c.h.b16 %v112
    %v779 = vunpack.c.l.b16 %v113
    %v780 = vunpack.c.h.b16 %v113
    %v781 = vunpack.c.l.b16 %v114
    %v782 = vunpack.c.h.b16 %v114
    %v783 = vunpack.c.l.b16 %v115
    %v784 = vunpack.c.h.b16 %v115
    %v785 = vunpack.c.l.b16 %v116
    %v786 = vunpack.c.h.b16 %v116
    %v787 = vunpack.c.l.b16 %v117
    %v788 = vunpack.c.h.b16 %v117
    %v789 = vunpack.c.l.b16 %v118
    %v790 = vunpack.c.h.b16 %v118
    %v791 = vunpack.c.l.b16 %v119
    %v792 = vunpack.c.h.b16 %v119
    %v793 = vunpack.c.l.b16 %v120
    %v794 = vunpack.c.h.b16 %v120
    %v795 = vunpack.c.l.b16 %v121
    %v796 = vunpack.c.h.b16 %v121
    %v797 = vunpack.c.l.b16 %v122
    %v798 = vunpack.c.h.b16 %v122
    %v799 = vunpack.c.l.b16 %v123
    %v800 = vunpack.c.h.b16 %v123
    %v801 = vunpack.c.l.b16 %v124
    %v802 = vunpack.c.h.b16 %v124
    %v803 = vunpack.c.l.b16 %v125
    %v804 = vunpack.c.h.b16 %v125
    %v805 = vunpack.c.l.b16 %v126
    %v806 = vunpack.c.h.b16 %v126
    %v807 = vunpack.c.l.b16 %v127
    %v808 = vunpack.c.h.b16 %v127
    %v809 = vunpack.c.l.b16 %v128
    %v810 = vunpack.c.h.b16 %v128
    %v811 = vunpack.c.l.b16 %v129
    %v812 = vunpack.c.h.b16 %v129
    %v813 = vunpack.c.l.b16 %v130
    %v814 = vunpack.c.h.b16 %v130
    %v815 = vunpack.c.l.b16 %v131
    %v816 = vunpack.c.h.b16 %v131
    %v817 = vunpack.c.l.b16 %v132
    %v818 = vunpack.c.h.b16 %v132
    %v819 = vunpack.c.l.b16 %v133
    %v820 = vunpack.c.h.b16 %v133
    %v821 = vunpack.c.l.b16 %v134
    %v822 = vunpack.c.h.b16 %v134
    %v823 = vunpack.c.l.b16 %v135
    %v824 = vunpack.c.h.b16 %v135
    %v825 = vunpack.c.l.b16 %v136
    %v826 = vunpack.c.h.b16 %v136
    %v827 = vunpack.c.l.b16 %v137
    %v828 = vunpack.c.h.b16 %v137
    %v829 = vunpack.c.l.b16 %v138
    %v830 = vunpack.c.h.b16 %v138
    %v831 = vunpack.c.l.b16 %v139
    %v832 = vunpack.c.h.b16 %v139
    %v833 = vunpack.c.l.b16 %v140
    %v834 = vunpack.c.h.b16 %v140
    %v835 = vunpack.c.l.b16 %v141
    %v836 = vunpack.c.h.b16 %v141
    %v837 = vunpack.c.l.b16 %v142
    %v838 = vunpack.c.h.b16 %v142
    %v839 = vunpack.c.l.b16 %v143
    %v840 = vunpack.c.h.b16 %v143
    %v841 = vunpack.c.l.b16 %v144
    %v842 = vunpack.c.h.b16 %v144
    %v843 = vunpack.c.l.b16 %v145
    %v844 = vunpack.c.h.b16 %v145
    %v845 = vunpack.c.l.b16 %v146
    %v846 = vunpack.c.h.b16 %v146
    %v847 = vunpack.c.l.b16 %v147
    %v848 = vunpack.c.h.b16 %v147
    %v849 = vunpack.c.l.b16 %v148
    %v850 = vunpack.c.h.b16 %v148
    %v851 = vunpack.c.l.b16 %v149
    %v852 = vunpack.c.h.b16 %v149
    %v853 = vunpack.c.l.b16 %v150
    %v854 = vunpack.c.h.b16 %v150
    %v855 = vunpack.c.l.b16 %v151
    %v856 = vunpack.c.h.b16 %v151
    %v857 = vunpack.c.l.b16 %v152
    %v858 = vunpack.c.h.b16 %v152
    %v859 = vunpack.c.l.b16 %v153
    %v860 = vunpack.c.h.b16 %v153
    %v861 = vunpack.c.l.b16 %v154
    %v862 = vunpack.c.h.b16 %v154
    %v863 = vunpack.c.l.b16 %v155
    %v864 = vunpack.c.h.b16 %v155
    %v865 = vunpack.c.l.b16 %v156
    %v866 = vunpack.c.h.b16 %v156
    %v867 = vunpack.c.l.b16 %v157
    %v868 = vunpack.c.h.b16 %v157
    %v869 = vunpack.c.l.b16 %v158
    %v870 = vunpack.c.h.b16 %v158
    %v871 = vunpack.c.l.b16 %v159
    %v872 = vunpack.c.h.b16 %v159
    %v873 = vunpack.c.l.b16 %v160
    %v874 = vunpack.c.h.b16 %v160
    %v875 = vunpack.c.l.b16 %v161
    %v876 = vunpack.c.h.b16 %v161
    %v877 = vunpack.c.l.b16 %v162
    %v878 = vunpack.c.h.b16 %v162
    %v879 = vunpack.c.l.b16 %v163
    %v880 = vunpack.c.h.b16 %v163
    %v881 = vunpack.c.l.b16 %v164
    %v882 = vunpack.c.h.b16 %v164
    %v883 = vunpack.c.l.b16 %v165
    %v884 = vunpack.c.h.b16 %v165
    %v885 = vunpack.c.l.b16 %v166
    %v886 = vunpack.c.h.b16 %v166
    %v887 = vunpack.c.l.b16 %v167
    %v888 = vunpack.c.h.b16 %v167
    %v889 = vunpack.c.l.b16 %v168
    %v890 = vunpack.c.h.b16 %v168
    %v891 = vunpack.c.l.b16 %v169
    %v892 = vunpack.c.h.b16 %v169
    %v893 = vunpack.c.l.b16 %v170
    %v894 = vunpack.c.h.b16 %v170
    %v895 = vunpack.c.l.b16 %v171
    %v896 = vunpack.c.h.b16 %v171
    %v897 = vunpack.c.l.b16 %v172
    %v898 = vunpack.c.h.b16 %v172
    %v899 = vunpack.c.l.b16 %v173
    %v900 = vunpack.c.h.b16 %v173
    %v901 = vunpack.c.l.b16 %v174
    %v902 = vunpack.c.h.b16 %v174
    %v903 = vunpack.c.l.b16 %v175
    %v904 = vunpack.c.h.b16 %v175
    %v905 = vunpack.c.l.b16 %v176
    %v906 = vunpack.c.h.b16 %v176
    %v907 = vunpack.c.l.b16 %v177
    %v908 = vunpack.c.h.b16 %v177
    %v909 = vunpack.c.l.b16 %v178
    %v910 = vunpack.c.h.b16 %v178
    %v911 = vunpack.c.l.b16 %v179
    %v912 = vunpack.c.h.b16 %v179
    %v913 = vunpack.c.l.b16 %v180
    %v914 = vunpack.c.h.b16 %v180
    %v915 = vunpack.c.l.b16 %v181
    %v916 = vunpack.c.h.b16 %v181
    %v917 = vunpack.c.l.b16 %v182
    %v918 = vunpack.c.h.b16 %v182
    %v919 = vunpack.c.l.b16 %v183
    %v920 = vunpack.c.h.b16 %v183
    %v921 = vunpack.c.l.b16 %v184
    %v922 = vunpack.c.h.b16 %v184
    %v923 = vunpack.c.l.b16 %v185
    %v924 = vunpack.c.h.b16 %v185
    %v925 = vunpack.c.l.b16 %v186
    %v926 = vunpack.c.h.b16 %v186
    %v927 = vunpack.c.l.b16 %v187
    %v928 = vunpack.c.h.b16 %v187
    %v929 = vunpack.c.l.b16 %v188
    %v930 = vunpack.c.h.b16 %v188
    %v931 = vunpack.c.l.b16 %v189
    %v932 = vunpack.c.h.b16 %v189
    %v933 = vunpack.c.l.b16 %v190
    %v934 = vunpack.c.h.b16 %v190
    %v935 = vunpack.c.l.b16 %v191
    %v936 = vunpack.c.h.b16 %v191
    %v937 = vunpack.c.l.b16 %v192
    %v938 = vunpack.c.h.b16 %v192
    %v939 = vunpack.c.l.b16 %v193
    %v940 = vunpack.c.h.b16 %v193
    %v941 = vunpack.c.l.b16 %v194
    %v942 = vunpack.c.h.b16 %v194
    %v943 = vunpack.c.l.b16 %v195
    %v944 = vunpack.c.h.b16 %v195
    %v945 = vunpack.c.l.b16 %v196
    %v946 = vunpack.c.h.b16 %v196
    %v947 = vunpack.c.l.b16 %v197
    %v948 = vunpack.c.h.b16 %v197
    %v949 = vunpack.c.l.b16 %v198
    %v950 = vunpack.c.h.b16 %v198
    %v951 = vunpack.c.l.b16 %v199
    %v952 = vunpack.c.h.b16 %v199
    %v953 = vunpack.c.l.b16 %v200
    %v954 = vunpack.c.h.b16 %v200
    %v955 = vunpack.c.l.b16 %v201
    %v956 = vunpack.c.h.b16 %v201
    %v957 = vunpack.c.l.b16 %v202
    %v958 = vunpack.c.h.b16 %v202
    %v959 = vunpack.c.l.b16 %v203
    %v960 = vunpack.c.h.b16 %v203
    %v961 = vunpack.c.l.b16 %v204
    %v962 = vunpack.c.h.b16 %v204
    %v963 = vunpack.c.l.b16 %v205
    %v964 = vunpack.c.h.b16 %v205
    %v965 = vunpack.c.l.b16 %v206
    %v966 = vunpack.c.h.b16 %v206
    %v967 = vunpack.c.l.b16 %v207
    %v968 = vunpack.c.h.b16 %v207
    %v969 = vunpack.c.l.b16 %v208
    %v970 = vunpack.c.h.b16 %v208
    %v971 = vunpack.c.l.b16 %v209
    %v972 = vunpack.c.h.b16 %v209
    %v973 = vunpack.c.l.b16 %v210
    %v974 = vunpack.c.h.b16 %v210
    %v975 = vunpack.c.l.b16 %v211
    %v976 = vunpack.c.h.b16 %v211
    %v977 = vunpack.c.l.b16 %v212
    %v978 = vunpack.c.h.b16 %v212
    %v979 = vunpack.c.l.b16 %v213
    %v980 = vunpack.c.h.b16 %v213
    %v981 = vunpack.c.l.b16 %v214
    %v982 = vunpack.c.h.b16 %v214
    %v983 = vunpack.c.l.b16 %v215
    %v984 = vunpack.c.h.b16 %v215
    %v985 = vunpack.c.l.b16 %v216
    %v986 = vunpack.c.h.b16 %v216
    %v987 = vunpack.c.l.b16 %v217
    %v988 = vunpack.c.h.b16 %v217
    %v989 = vunpack.c.l.b16 %v218
    %v990 = vunpack.c.h.b16 %v218
    %v991 = vunpack.c.l.b16 %v219
    %v992 = vunpack.c.h.b16 %v219
    %v993 = vunpack.c.l.b16 %v220
    %v994 = vunpack.c.h.b16 %v220
    %v995 = vunpack.c.l.b16 %v221
    %v996 = vunpack.c.h.b16 %v221
    %v997 = vunpack.c.l.b16 %v222
    %v998 = vunpack.c.h.b16 %v222
    %v999 = vunpack.c.l.b16 %v223
    %v1000 = vunpack.c.h.b16 %v223
    %v1001 = vunpack.c.l.b16 %v224
    %v1002 = vunpack.c.h.b16 %v224
    %v1003 = vunpack.c.l.b16 %v225
    %v1004 = vunpack.c.h.b16 %v225
    %v1005 = vunpack.c.l.b16 %v226
    %v1006 = vunpack.c.h.b16 %v226
    %v1007 = vunpack.c.l.b16 %v227
    %v1008 = vunpack.c.h.b16 %v227
    %v1009 = vunpack.c.l.b16 %v228
    %v1010 = vunpack.c.h.b16 %v228
    %v1011 = vunpack.c.l.b16 %v229
    %v1012 = vunpack.c.h.b16 %v229
    %v1013 = vunpack.c.l.b16 %v230
    %v1014 = vunpack.c.h.b16 %v230
    %v1015 = vunpack.c.l.b16 %v231
    %v1016 = vunpack.c.h.b16 %v231
    %v1017 = vunpack.c.l.b16 %v232
    %v1018 = vunpack.c.h.b16 %v232
    %v1019 = vunpack.c.l.b16 %v233
    %v1020 = vunpack.c.h.b16 %v233
    %v1021 = vunpack.c.l.b16 %v234
    %v1022 = vunpack.c.h.b16 %v234
    %v1023 = vunpack.c.l.b16 %v235
    %v1024 = vunpack.c.h.b16 %v235
    %v1025 = vunpack.c.l.b16 %v236
    %v1026 = vunpack.c.h.b16 %v236
    %v1027 = vunpack.c.l.b16 %v237
    %v1028 = vunpack.c.h.b16 %v237
    %v1029 = vunpack.c.l.b16 %v238
    %v1030 = vunpack.c.h.b16 %v238
    %v1031 = vunpack.c.l.b16 %v239
    %v1032 = vunpack.c.h.b16 %v239
    %v1033 = vunpack.c.l.b16 %v240
    %v1034 = vunpack.c.h.b16 %v240
    %v1035 = vunpack.c.l.b16 %v241
    %v1036 = vunpack.c.h.b16 %v241
    %v1037 = vunpack.c.l.b16 %v242
    %v1038 = vunpack.c.h.b16 %v242
    %v1039 = vunpack.c.l.b16 %v243
    %v1040 = vunpack.c.h.b16 %v243
    %v1041 = vunpack.c.l.b16 %v244
    %v1042 = vunpack.c.h.b16 %v244
    %v1043 = vunpack.c.l.b16 %v245
    %v1044 = vunpack.c.h.b16 %v245
    %v1045 = vunpack.c.l.b16 %v246
    %v1046 = vunpack.c.h.b16 %v246
    %v1047 = vunpack.c.l.b16 %v247
    %v1048 = vunpack.c.h.b16 %v247
    %v1049 = vunpack.c.l.b16 %v248
    %v1050 = vunpack.c.h.b16 %v248
    %v1051 = vunpack.c.l.b16 %v249
    %v1052 = vunpack.c.h.b16 %v249
    %v1053 = vunpack.c.l.b16 %v250
    %v1054 = vunpack.c.h.b16 %v250
    %v1055 = vunpack.c.l.b16 %v251
    %v1056 = vunpack.c.h.b16 %v251
    %v1057 = vunpack.c.l.b16 %v252
    %v1058 = vunpack.c.h.b16 %v252
    %v1059 = vunpack.c.l.b16 %v253
    %v1060 = vunpack.c.h.b16 %v253
    %v1061 = vunpack.c.l.b16 %v254
    %v1062 = vunpack.c.h.b16 %v254
    %v1063 = vunpack.c.l.b16 %v255
    %v1064 = vunpack.c.h.b16 %v255
    %v1065 = vunpack.c.l.b16 %v256
    %v1066 = vunpack.c.h.b16 %v256
    %v1067 = vunpack.c.l.b16 %v257
    %v1068 = vunpack.c.h.b16 %v257
    %v1069 = vunpack.c.l.b16 %v258
    %v1070 = vunpack.c.h.b16 %v258
    %v1071 = vunpack.c.l.b16 %v259
    %v1072 = vunpack.c.h.b16 %v259
    %v1073 = vunpack.c.l.b16 %v260
    %v1074 = vunpack.c.h.b16 %v260
    %v1075 = vunpack.c.l.b16 %v261
    %v1076 = vunpack.c.h.b16 %v261
    %v1077 = vunpack.c.l.b16 %v262
    %v1078 = vunpack.c.h.b16 %v262
    %v1079 = vunpack.c.l.b16 %v263
    %v1080 = vunpack.c.h.b16 %v263
    %v1081 = vunpack.c.l.b16 %v264
    %v1082 = vunpack.c.h.b16 %v264
    %v1083 = vunpack.c.l.b16 %v265
    %v1084 = vunpack.c.h.b16 %v265
    %v1085 = vunpack.c.l.b16 %v266
    %v1086 = vunpack.c.h.b16 %v266
    %v1087 = vunpack.c.l.b16 %v267
    %v1088 = vunpack.c.h.b16 %v267
    %v1089 = vunpack.c.l.b16 %v268
    %v1090 = vunpack.c.h.b16 %v268
    %v1091 = vunpack.c.l.b16 %v269
    %v1092 = vunpack.c.h.b16 %v269
    %v1093 = vunpack.c.l.b16 %v270
    %v1094 = vunpack.c.h.b16 %v270
    %v1095 = vunpack.c.l.b16 %v271
    %v1096 = vunpack.c.h.b16 %v271
    %v1097 = vunpack.c.l.b16 %v272
    %v1098 = vunpack.c.h.b16 %v272
    %v1099 = vunpack.c.l.b16 %v273
    %v1100 = vunpack.c.h.b16 %v273
    %v1101 = vunpack.c.l.b16 %v274
    %v1102 = vunpack.c.h.b16 %v274
    %v1103 = vunpack.c.l.b16 %v275
    %v1104 = vunpack.c.h.b16 %v275
    %v1105 = vunpack.c.l.b16 %v276
    %v1106 = vunpack.c.h.b16 %v276
    %v1107 = vunpack.c.l.b16 %v277
    %v1108 = vunpack.c.h.b16 %v277
    %v1109 = vunpack.c.l.b16 %v278
    %v1110 = vunpack.c.h.b16 %v278
    %v1111 = vunpack.c.l.b16 %v279
    %v1112 = vunpack.c.h.b16 %v279
    %v1113 = vunpack.c.l.b16 %v280
    %v1114 = vunpack.c.h.b16 %v280
    %v1115 = vunpack.c.l.b16 %v281
    %v1116 = vunpack.c.h.b16 %v281
    %v1117 = vunpack.c.l.b16 %v282
    %v1118 = vunpack.c.h.b16 %v282
    %v1119 = vunpack.c.l.b16 %v283
    %v1120 = vunpack.c.h.b16 %v283
    %v1121 = vunpack.c.l.b16 %v284
    %v1122 = vunpack.c.h.b16 %v284
    %v1123 = vunpack.c.l.b16 %v285
    %v1124 = vunpack.c.h.b16 %v285
    %v1125 = vunpack.c.l.b16 %v286
    %v1126 = vunpack.c.h.b16 %v286
    %v1127 = vunpack.c.l.b16 %v287
    %v1128 = vunpack.c.h.b16 %v287
    %v1129 = vunpack.c.l.b16 %v288
    %v1130 = vunpack.c.h.b16 %v288
    %v1131 = vunpack.c.l.b16 %v289
    %v1132 = vunpack.c.h.b16 %v289
    %v1133 = vunpack.c.l.b16 %v290
    %v1134 = vunpack.c.h.b16 %v290
    %v1135 = vunpack.c.l.b16 %v291
    %v1136 = vunpack.c.h.b16 %v291
    %v1137 = vunpack.c.l.b16 %v292
    %v1138 = vunpack.c.h.b16 %v292
    %v1139 = vunpack.c.l.b16 %v293
    %v1140 = vunpack.c.h.b16 %v293
    %v1141 = vunpack.c.l.b16 %v294
    %v1142 = vunpack.c.h.b16 %v294
    %v1143 = vunpack.c.l.b16 %v295
    %v1144 = vunpack.c.h.b16 %v295
    %v1145 = vunpack.c.l.b16 %v296
    %v1146 = vunpack.c.h.b16 %v296
    %v1147 = vunpack.c.l.b16 %v297
    %v1148 = vunpack.c.h.b16 %v297
    %v1149 = vunpack.c.l.b16 %v298
    %v1150 = vunpack.c.h.b16 %v298
    %v1151 = vunpack.c.l.b16 %v299
    %v1152 = vunpack.c.h.b16 %v299
    %v1153 = vunpack.c.l.b16 %v300
    %v1154 = vunpack.c.h.b16 %v300
    %v1155 = vunpack.c.l.b16 %v301
    %v1156 = vunpack.c.h.b16 %v301
    %v1157 = vunpack.c.l.b16 %v302
    %v1158 = vunpack.c.h.b16 %v302
    %v1159 = vunpack.c.l.b16 %v303
    %v1160 = vunpack.c.h.b16 %v303
    %v1161 = vunpack.c.l.b16 %v304
    %v1162 = vunpack.c.h.b16 %v304
    %v1163 = vunpack.c.l.b16 %v305
    %v1164 = vunpack.c.h.b16 %v305
    %v1165 = vunpack.c.l.b16 %v306
    %v1166 = vunpack.c.h.b16 %v306
    %v1167 = vunpack.c.l.b16 %v307
    %v1168 = vunpack.c.h.b16 %v307
    %v1169 = vunpack.c.l.b16 %v308
    %v1170 = vunpack.c.h.b16 %v308
    %v1171 = vunpack.c.l.b16 %v309
    %v1172 = vunpack.c.h.b16 %v309
    %v1173 = vunpack.c.l.b16 %v310
    %v1174 = vunpack.c.h.b16 %v310
    %v1175 = vunpack.c.l.b16 %v311
    %v1176 = vunpack.c.h.b16 %v311
    %v1177 = vunpack.c.l.b16 %v312
    %v1178 = vunpack.c.h.b16 %v312
    %v1179 = vunpack.c.l.b16 %v313
    %v1180 = vunpack.c.h.b16 %v313
    %v1181 = vunpack.c.l.b16 %v314
    %v1182 = vunpack.c.h.b16 %v314
    %v1183 = vunpack.c.l.b16 %v315
    %v1184 = vunpack.c.h.b16 %v315
    %v1185 = vunpack.c.l.b16 %v316
    %v1186 = vunpack.c.h.b16 %v316
    %v1187 = vunpack.c.l.b16 %v317
    %v1188 = vunpack.c.h.b16 %v317
    %v1189 = vunpack.c.l.b16 %v318
    %v1190 = vunpack.c.h.b16 %v318
    %v1191 = vunpack.c.l.b16 %v319
    %v1192 = vunpack.c.h.b16 %v319
    %v1193 = vunpack.c.l.b16 %v320
    %v1194 = vunpack.c.h.b16 %v320
    %v1195 = vunpack.c.l.b16 %v321
    %v1196 = vunpack.c.h.b16 %v321
    %v1197 = vunpack.c.l.b16 %v322
    %v1198 = vunpack.c.h.b16 %v322
    %v1199 = vunpack.c.l.b16 %v323
    %v1200 = vunpack.c.h.b16 %v323
    %v1201 = vunpack.c.l.b16 %v324
    %v1202 = vunpack.c.h.b16 %v324
    %v1203 = vunpack.c.l.b16 %v325
    %v1204 = vunpack.c.h.b16 %v325
    %v1205 = vunpack.c.l.b16 %v326
    %v1206 = vunpack.c.h.b16 %v326
    %v1207 = vunpack.c.l.b16 %v327
    %v1208 = vunpack.c.h.b16 %v327
    %v1209 = vunpack.c.l.b16 %v328
    %v1210 = vunpack.c.h.b16 %v328
    %v1211 = vunpack.c.l.b16 %v329
    %v1212 = vunpack.c.h.b16 %v329
    %v1213 = vunpack.c.l.b16 %v330
    %v1214 = vunpack.c.h.b16 %v330
    %v1215 = vunpack.c.l.b16 %v331
    %v1216 = vunpack.c.h.b16 %v331
    %v1217 = vunpack.c.l.b16 %v332
    %v1218 = vunpack.c.h.b16 %v332
    %v1219 = vunpack.c.l.b16 %v333
    %v1220 = vunpack.c.h.b16 %v333
    %v1221 = vunpack.c.l.b16 %v334
    %v1222 = vunpack.c.h.b16 %v334
    %v1223 = vunpack.c.l.b16 %v335
    %v1224 = vunpack.c.h.b16 %v335
    %v1225 = vunpack.c.l.b16 %v336
    %v1226 = vunpack.c.h.b16 %v336
    %v1227 = vunpack.c.l.b16 %v337
    %v1228 = vunpack.c.h.b16 %v337
    %v1229 = vunpack.c.l.b16 %v338
    %v1230 = vunpack.c.h.b16 %v338
    %v1231 = vunpack.c.l.b16 %v339
    %v1232 = vunpack.c.h.b16 %v339
    %v1233 = vunpack.c.l.b16 %v340
    %v1234 = vunpack.c.h.b16 %v340
    %v1235 = vunpack.c.l.b16 %v341
    %v1236 = vunpack.c.h.b16 %v341
    %v1237 = vunpack.c.l.b16 %v342
    %v1238 = vunpack.c.h.b16 %v342
    %v1239 = vunpack.c.l.b16 %v343
    %v1240 = vunpack.c.h.b16 %v343
    %v1241 = vunpack.c.l.b16 %v344
    %v1242 = vunpack.c.h.b16 %v344
    %v1243 = vunpack.c.l.b16 %v345
    %v1244 = vunpack.c.h.b16 %v345
    %v1245 = vunpack.c.l.b16 %v346
    %v1246 = vunpack.c.h.b16 %v346
    %v1247 = vunpack.c.l.b16 %v347
    %v1248 = vunpack.c.h.b16 %v347
    %v1249 = vunpack.c.l.b16 %v348
    %v1250 = vunpack.c.h.b16 %v348
    %v1251 = vunpack.c.l.b16 %v349
    %v1252 = vunpack.c.h.b16 %v349
    %v1253 = vunpack.c.l.b16 %v350
    %v1254 = vunpack.c.h.b16 %v350
    %v1255 = vunpack.c.l.b16 %v351
    %v1256 = vunpack.c.h.b16 %v351
    %v1257 = vunpack.c.l.b16 %v352
    %v1258 = vunpack.c.h.b16 %v352
    %v1259 = vunpack.c.l.b16 %v353
    %v1260 = vunpack.c.h.b16 %v353
    %v1261 = vunpack.c.l.b16 %v354
    %v1262 = vunpack.c.h.b16 %v354
    %v1263 = vunpack.c.l.b16 %v355
    %v1264 = vunpack.c.h.b16 %v355
    %v1265 = vunpack.c.l.b16 %v356
    %v1266 = vunpack.c.h.b16 %v356
    %v1267 = vunpack.c.l.b16 %v357
    %v1268 = vunpack.c.h.b16 %v357
    %v1269 = vunpack.c.l.b16 %v358
    %v1270 = vunpack.c.h.b16 %v358
    %v1271 = vunpack.c.l.b16 %v359
    %v1272 = vunpack.c.h.b16 %v359
    %v1273 = vunpack.c.l.b16 %v360
    %v1274 = vunpack.c.h.b16 %v360
    %v1275 = vunpack.c.l.b16 %v361
    %v1276 = vunpack.c.h.b16 %v361
    %v1277 = vunpack.c.l.b16 %v362
    %v1278 = vunpack.c.h.b16 %v362
    %v1279 = vunpack.c.l.b16 %v363
    %v1280 = vunpack.c.h.b16 %v363
    %v1281 = vunpack.c.l.b16 %v364
    %v1282 = vunpack.c.h.b16 %v364
    %v1283 = vpack.c.b16 %v711, %v707
    %v1284 = vpack.c.b16 %v712, %v708
    %v1285 = vpack.c.b16 %v713, %v709
    %v1286 = vpack.c.b16 %v714, %v710
    %v1287 = vpack.c.b16 %v719, %v715
    %v1288 = vpack.c.b16 %v720, %v716
    %v1289 = vpack.c.b16 %v721, %v717
    %v1290 = vpack.c.b16 %v722, %v718
    %v1291 = vpack.c.b16 %v727, %v723
    %v1292 = vpack.c.b16 %v728, %v724
    %v1293 = vpack.c.b16 %v729, %v725
    %v1294 = vpack.c.b16 %v730, %v726
    %v1295 = vpack.c.b16 %v735, %v731
    %v1296 = vpack.c.b16 %v736, %v732
    %v1297 = vpack.c.b16 %v737, %v733
    %v1298 = vpack.c.b16 %v738, %v734
    %v1299 = vpack.c.b16 %v743, %v739
    %v1300 = vpack.c.b16 %v744, %v740
    %v1301 = vpack.c.b16 %v745, %v741
    %v1302 = vpack.c.b16 %v746, %v742
    %v1303 = vpack.c.b16 %v751, %v747
    %v1304 = vpack.c.b16 %v752, %v748
    %v1305 = vpack.c.b16 %v753, %v749
    %v1306 = vpack.c.b16 %v754, %v750
    %v1307 = vpack.c.b16 %v759, %v755
    %v1308 = vpack.c.b16 %v760, %v756
    %v1309 = vpack.c.b16 %v761, %v757
    %v1310 = vpack.c.b16 %v762, %v758
    %v1311 = vpack.c.b16 %v767, %v763
    %v1312 = vpack.c.b16 %v768, %v764
    %v1313 = vpack.c.b16 %v769, %v765
    %v1314 = vpack.c.b16 %v770, %v766
    %v1315 = vpack.c.b16 %v775, %v771
    %v1316 = vpack.c.b16 %v776, %v772
    %v1317 = vpack.c.b16 %v777, %v773
    %v1318 = vpack.c.b16 %v778, %v774
    %v1319 = vpack.c.b16 %v783, %v779
    %v1320 = vpack.c.b16 %v784, %v780
    %v1321 = vpack.c.b16 %v785, %v781
    %v1322 = vpack.c.b16 %v786, %v782
    %v1323 = vpack.c.b16 %v791, %v787
    %v1324 = vpack.c.b16 %v792, %v788
    %v1325 = vpack.c.b16 %v793, %v789
    %v1326 = vpack.c.b16 %v794, %v790
    %v1327 = vpack.c.b16 %v799, %v795
    %v1328 = vpack.c.b16 %v800, %v796
    %v1329 = vpack.c.b16 %v801, %v797
    %v1330 = vpack.c.b16 %v802, %v798
    %v1331 = vpack.c.b16 %v807, %v803
    %v1332 = vpack.c.b16 %v808, %v804
    %v1333 = vpack.c.b16 %v809, %v805
    %v1334 = vpack.c.b16 %v810, %v806
    %v1335 = vpack.c.b16 %v815, %v811
    %v1336 = vpack.c.b16 %v816, %v812
    %v1337 = vpack.c.b16 %v817, %v813
    %v1338 = vpack.c.b16 %v818, %v814
    %v1339 = vpack.c.b16 %v823, %v819
    %v1340 = vpack.c.b16 %v824, %v820
    %v1341 = vpack.c.b16 %v825, %v821
    %v1342 = vpack.c.b16 %v826, %v822
    %v1343 = vpack.c.b16 %v831, %v827
    %v1344 = vpack.c.b16 %v832, %v828
    %v1345 = vpack.c.b16 %v833, %v829
    %v1346 = vpack.c.b16 %v834, %v830
    %v1347 = vpack.c.b16 %v839, %v835
    %v1348 = vpack.c.b16 %v840, %v836
    %v1349 = vpack.c.b16 %v841, %v837
    %v1350 = vpack.c.b16 %v842, %v838
    %v1351 = vpack.c.b16 %v847, %v843
    %v1352 = vpack.c.b16 %v848, %v844
    %v1353 = vpack.c.b16 %v849, %v845
    %v1354 = vpack.c.b16 %v850, %v846
    %v1355 = vpack.c.b16 %v855, %v851
    %v1356 = vpack.c.b16 %v856, %v852
    %v1357 = vpack.c.b16 %v857, %v853
    %v1358 = vpack.c.b16 %v858, %v854
    %v1359 = vpack.c.b16 %v863, %v859
    %v1360 = vpack.c.b16 %v864, %v860
    %v1361 = vpack.c.b16 %v865, %v861
    %v1362 = vpack.c.b16 %v866, %v862
    %v1363 = vpack.c.b16 %v871, %v867
    %v1364 = vpack.c.b16 %v872, %v868
    %v1365 = vpack.c.b16 %v873, %v869
    %v1366 = vpack.c.b16 %v874, %v870
    %v1367 = vpack.c.b16 %v879, %v875
    %v1368 = vpack.c.b16 %v880, %v876
    %v1369 = vpack.c.b16 %v881, %v877
    %v1370 = vpack.c.b16 %v882, %v878
    %v1371 = vpack.c.b16 %v887, %v883
    %v1372 = vpack.c.b16 %v888, %v884
    %v1373 = vpack.c.b16 %v889, %v885
    %v1374 = vpack.c.b16 %v890, %v886
    %v1375 = vpack.c.b16 %v895, %v891
    %v1376 = vpack.c.b16 %v896, %v892
    %v1377 = vpack.c.b16 %v897, %v893
    %v1378 = vpack.c.b16 %v898, %v894
    %v1379 = vpack.c.b16 %v903, %v899
    %v1380 = vpack.c.b16 %v904, %v900
    %v1381 = vpack.c.b16 %v905, %v901
    %v1382 = vpack.c.b16 %v906, %v902
    %v1383 = vpack.c.b16 %v911, %v907
    %v1384 = vpack.c.b16 %v912, %v908
    %v1385 = vpack.c.b16 %v913, %v909
    %v1386 = vpack.c.b16 %v914, %v910
    %v1387 = vpack.c.b16 %v919, %v915
    %v1388 = vpack.c.b16 %v920, %v916
    %v1389 = vpack.c.b16 %v921, %v917
    %v1390 = vpack.c.b16 %v922, %v918
    %v1391 = vpack.c.b16 %v927, %v923
    %v1392 = vpack.c.b16 %v928, %v924
    %v1393 = vpack.c.b16 %v929, %v925
    %v1394 = vpack.c.b16 %v930, %v926
    %v1395 = vpack.c.b16 %v935, %v931
    %v1396 = vpack.c.b16 %v936, %v932
    %v1397 = vpack.c.b16 %v937, %v933
    %v1398 = vpack.c.b16 %v938, %v934
    %v1399 = vpack.c.b16 %v943, %v939
    %v1400 = vpack.c.b16 %v944, %v940
    %v1401 = vpack.c.b16 %v945, %v941
    %v1402 = vpack.c.b16 %v946, %v942
    %v1403 = vpack.c.b16 %v951, %v947
    %v1404 = vpack.c.b16 %v952, %v948
    %v1405 = vpack.c.b16 %v953, %v949
    %v1406 = vpack.c.b16 %v954, %v950
    %v1407 = vpack.c.b16 %v959, %v955
    %v1408 = vpack.c.b16 %v960, %v956
    %v1409 = vpack.c.b16 %v961, %v957
    %v1410 = vpack.c.b16 %v962, %v958
    %v1411 = vpack.c.b16 %v967, %v963
    %v1412 = vpack.c.b16 %v968, %v964
    %v1413 = vpack.c.b16 %v969, %v965
    %v1414 = vpack.c.b16 %v970, %v966
    %v1415 = vpack.c.b16 %v975, %v971
    %v1416 = vpack.c.b16 %v976, %v972
    %v1417 = vpack.c.b16 %v977, %v973
    %v1418 = vpack.c.b16 %v978, %v974
    %v1419 = vpack.c.b16 %v983, %v979
    %v1420 = vpack.c.b16 %v984, %v980
    %v1421 = vpack.c.b16 %v985, %v981
    %v1422 = vpack.c.b16 %v986, %v982
    %v1423 = vpack.c.b16 %v991, %v987
    %v1424 = vpack.c.b16 %v992, %v988
    %v1425 = vpack.c.b16 %v993, %v989
    %v1426 = vpack.c.b16 %v994, %v990
    %v1427 = vpack.c.b16 %v999, %v995
    %v1428 = vpack.c.b16 %v1000, %v996
    %v1429 = vpack.c.b16 %v1001, %v997
    %v1430 = vpack.c.b16 %v1002, %v998
    %v1431 = vpack.c.b16 %v1007, %v1003
    %v1432 = vpack.c.b16 %v1008, %v1004
    %v1433 = vpack.c.b16 %v1009, %v1005
    %v1434 = vpack.c.b16 %v1010, %v1006
    %v1435 = vpack.c.b16 %v1015, %v1011
    %v1436 = vpack.c.b16 %v1016, %v1012
    %v1437 = vpack.c.b16 %v1017, %v1013
    %v1438 = vpack.c.b16 %v1018, %v1014
    %v1439 = vpack.c.b16 %v1023, %v1019
    %v1440 = vpack.c.b16 %v1024, %v1020
    %v1441 = vpack.c.b16 %v1025, %v1021
    %v1442 = vpack.c.b16 %v1026, %v1022
    %v1443 = vpack.c.b16 %v1031, %v1027
    %v1444 = vpack.c.b16 %v1032, %v1028
    %v1445 = vpack.c.b16 %v1033, %v1029
    %v1446 = vpack.c.b16 %v1034, %v1030
    %v1447 = vpack.c.b16 %v1039, %v1035
    %v1448 = vpack.c.b16 %v1040, %v1036
    %v1449 = vpack.c.b16 %v1041, %v1037
    %v1450 = vpack.c.b16 %v1042, %v1038
    %v1451 = vpack.c.b16 %v1047, %v1043
    %v1452 = vpack.c.b16 %v1048, %v1044
    %v1453 = vpack.c.b16 %v1049, %v1045
    %v1454 = vpack.c.b16 %v1050, %v1046
    %v1455 = vpack.c.b16 %v1055, %v1051
    %v1456 = vpack.c.b16 %v1056, %v1052
    %v1457 = vpack.c.b16 %v1057, %v1053
    %v1458 = vpack.c.b16 %v1058, %v1054
    %v1459 = vpack.c.b16 %v1063, %v1059
    %v1460 = vpack.c.b16 %v1064, %v1060
    %v1461 = vpack.c.b16 %v1065, %v1061
    %v1462 = vpack.c.b16 %v1066, %v1062
    %v1463 = vpack.c.b16 %v1071, %v1067
    %v1464 = vpack.c.b16 %v1072, %v1068
    %v1465 = vpack.c.b16 %v1073, %v1069
    %v1466 = vpack.c.b16 %v1074, %v1070
    %v1467 = vpack.c.b16 %v1079, %v1075
    %v1468 = vpack.c.b16 %v1080, %v1076
    %v1469 = vpack.c.b16 %v1081, %v1077
    %v1470 = vpack.c.b16 %v1082, %v1078
    %v1471 = vpack.c.b16 %v1087, %v1083
    %v1472 = vpack.c.b16 %v1088, %v1084
    %v1473 = vpack.c.b16 %v1089, %v1085
    %v1474 = vpack.c.b16 %v1090, %v1086
    %v1475 = vpack.c.b16 %v1095, %v1091
    %v1476 = vpack.c.b16 %v1096, %v1092
    %v1477 = vpack.c.b16 %v1097, %v1093
    %v1478 = vpack.c.b16 %v1098, %v1094
    %v1479 = vpack.c.b16 %v1103, %v1099
    %v1480 = vpack.c.b16 %v1104, %v1100
    %v1481 = vpack.c.b16 %v1105, %v1101
    %v1482 = vpack.c.b16 %v1106, %v1102
    %v1483 = vpack.c.b16 %v1111, %v1107
    %v1484 = vpack.c.b16 %v1112, %v1108
    %v1485 = vpack.c.b16 %v1113, %v1109
    %v1486 = vpack.c.b16 %v1114, %v1110
    %v1487 = vpack.c.b16 %v1119, %v1115
    %v1488 = vpack.c.b16 %v1120, %v1116
    %v1489 = vpack.c.b16 %v1121, %v1117
    %v1490 = vpack.c.b16 %v1122, %v1118
    %v1491 = vpack.c.b16 %v1127, %v1123
    %v1492 = vpack.c.b16 %v1128, %v1124
    %v1493 = vpack.c.b16 %v1129, %v1125
    %v1494 = vpack.c.b16 %v1130, %v1126
    %v1495 = vpack.c.b16 %v1135, %v1131
    %v1496 = vpack.c.b16 %v1136, %v1132
    %v1497 = vpack.c.b16 %v1137, %v1133
    %v1498 = vpack.c.b16 %v1138, %v1134
    %v1499 = vpack.c.b16 %v1143, %v1139
    %v1500 = vpack.c.b16 %v1144, %v1140
    %v1501 = vpack.c.b16 %v1145, %v1141
    %v1502 = vpack.c.b16 %v1146, %v1142
    %v1503 = vpack.c.b16 %v1151, %v1147
    %v1504 = vpack.c.b16 %v1152, %v1148
    %v1505 = vpack.c.b16 %v1153, %v1149
    %v1506 = vpack.c.b16 %v1154, %v1150
    %v1507 = vpack.c.b16 %v1159, %v1155
    %v1508 = vpack.c.b16 %v1160, %v1156
    %v1509 = vpack.c.b16 %v1161, %v1157
    %v1510 = vpack.c.b16 %v1162, %v1158
    %v1511 = vpack.c.b16 %v1167, %v1163
    %v1512 = vpack.c.b16 %v1168, %v1164
    %v1513 = vpack.c.b16 %v1169, %v1165
    %v1514 = vpack.c.b16 %v1170, %v1166
    %v1515 = vpack.c.b16 %v1175, %v1171
    %v1516 = vpack.c.b16 %v1176, %v1172
    %v1517 = vpack.c.b16 %v1177, %v1173
    %v1518 = vpack.c.b16 %v1178, %v1174
    %v1519 = vpack.c.b16 %v1183, %v1179
    %v1520 = vpack.c.b16 %v1184, %v1180
    %v1521 = vpack.c.b16 %v1185, %v1181
    %v1522 = vpack.c.b16 %v1186, %v1182
    %v1523 = vpack.c.b16 %v1191, %v1187
    %v1524 = vpack.c.b16 %v1192, %v1188
    %v1525 = vpack.c.b16 %v1193, %v1189
    %v1526 = vpack.c.b16 %v1194, %v1190
    %v1527 = vpack.c.b16 %v1199, %v1195
    %v1528 = vpack.c.b16 %v1200, %v1196
    %v1529 = vpack.c.b16 %v1201, %v1197
    %v1530 = vpack.c.b16 %v1202, %v1198
    %v1531 = vpack.c.b16 %v1207, %v1203
    %v1532 = vpack.c.b16 %v1208, %v1204
    %v1533 = vpack.c.b16 %v1209, %v1205
    %v1534 = vpack.c.b16 %v1210, %v1206
    %v1535 = vpack.c.b16 %v1215, %v1211
    %v1536 = vpack.c.b16 %v1216, %v1212
    %v1537 = vpack.c.b16 %v1217, %v1213
    %v1538 = vpack.c.b16 %v1218, %v1214
    %v1539 = vpack.c.b16 %v1223, %v1219
    %v1540 = vpack.c.b16 %v1224, %v1220
    %v1541 = vpack.c.b16 %v1225, %v1221
    %v1542 = vpack.c.b16 %v1226, %v1222
    %v1543 = vpack.c.b16 %v1231, %v1227
    %v1544 = vpack.c.b16 %v1232, %v1228
    %v1545 = vpack.c.b16 %v1233, %v1229
    %v1546 = vpack.c.b16 %v1234, %v1230
    %v1547 = vpack.c.b16 %v1239, %v1235
    %v1548 = vpack.c.b16 %v1240, %v1236
    %v1549 = vpack.c.b16 %v1241, %v1237
    %v1550 = vpack.c.b16 %v1242, %v1238
    %v1551 = vpack.c.b16 %v1247, %v1243
    %v1552 = vpack.c.b16 %v1248, %v1244
    %v1553 = vpack.c.b16 %v1249, %v1245
    %v1554 = vpack.c.b16 %v1250, %v1246
    %v1555 = vpack.c.b16 %v1255, %v1251
    %v1556 = vpack.c.b16 %v1256, %v1252
    %v1557 = vpack.c.b16 %v1257, %v1253
    %v1558 = vpack.c.b16 %v1258, %v1254
    %v1559 = vpack.c.b16 %v1263, %v1259
    %v1560 = vpack.c.b16 %v1264, %v1260
    %v1561 = vpack.c.b16 %v1265, %v1261
    %v1562 = vpack.c.b16 %v1266, %v1262
    %v1563 = vpack.c.b16 %v1271, %v1267
    %v1564 = vpack.c.b16 %v1272, %v1268
    %v1565 = vpack.c.b16 %v1273, %v1269
    %v1566 = vpack.c.b16 %v1274, %v1270
    %v1567 = vpack.c.b16 %v1279, %v1275
    %v1568 = vpack.c.b16 %v1280, %v1276
    %v1569 = vpack.c.b16 %v1281, %v1277
    %v1570 = vpack.c.b16 %v1282, %v1278
    %1859 = vmatprep.subr.bf16.mxu0 %v1312
    %1860 = vmatpush1.bf16.msra.mxu0 %v1311
    %1861 = vmatprep.subr.bf16.mxu0 %v1308
    %1862 = vmatpush1.bf16.msra.mxu0 %v1307
    %1863 = vmatprep.subr.bf16.mxu0 %v1304
    %1864 = vmatpush1.bf16.msra.mxu0 %v1303
    %1865 = vmatprep.subr.bf16.mxu0 %v1300
    %1866 = vmatpush1.bf16.msra.mxu0 %v1299
    %1867 = vmatprep.subr.bf16.mxu0 %v1296
    %1868 = vmatpush1.bf16.msra.mxu0 %v1295
    %1869 = vmatprep.subr.bf16.mxu0 %v1292
    %1870 = vmatpush1.bf16.msra.mxu0 %v1291
    %1871 = vmatprep.subr.bf16.mxu0 %v1288
    %1872 = vmatpush1.bf16.msra.mxu0 %v1287
    %1873 = vmatprep.subr.bf16.mxu0 %v1284
    %1874 = vmatpush1.bf16.msra.mxu0 %v1283
    %1875 = vmatprep.subr.bf16.mxu0 %v1344
    %1876 = vmatpush2.bf16.msra.mxu0 %v1343
    %1877 = vmatprep.subr.bf16.mxu0 %v1340
    %1878 = vmatpush2.bf16.msra.mxu0 %v1339
    %1879 = vmatprep.subr.bf16.mxu0 %v1336
    %1880 = vmatpush2.bf16.msra.mxu0 %v1335
    %1881 = vmatprep.subr.bf16.mxu0 %v1332
    %1882 = vmatpush2.bf16.msra.mxu0 %v1331
    %1883 = vmatprep.subr.bf16.mxu0 %v1328
    %1884 = vmatpush2.bf16.msra.mxu0 %v1327
    %1885 = vmatprep.subr.bf16.mxu0 %v1324
    %1886 = vmatpush2.bf16.msra.mxu0 %v1323
    %1887 = vmatprep.subr.bf16.mxu0 %v1320
    %1888 = vmatpush2.bf16.msra.mxu0 %v1319
    %1889 = vmatprep.subr.bf16.mxu0 %v1316
    %1890 = vmatpush2.bf16.msra.mxu0 %v1315
    %1891 = vmatprep.mubr.bf16.mxu0 %v402
    %1892 = vmatmul.mubr.bf16.gmra.mxu0 %v401
    %v1893 = vpop.f32.mrf.mxu0
    %v1894 = vadd.f32 %v370, %v1893
    %v1895 = vpop.f32.mrf.mxu0
    %v1896 = vadd.f32 %v374, %v1895
    %v1897 = vpop.f32.mrf.mxu0
    %v1898 = vpop.f32.mrf.mxu0
    %1899 = vdwg.mxu0
    %1900 = vmatprep.subr.bf16.mxu0 %v1376
    %1901 = vmatpush1.bf16.msra.mxu0 %v1375
    %1902 = vmatprep.subr.bf16.mxu0 %v1372
    %1903 = vmatpush1.bf16.msra.mxu0 %v1371
    %1904 = vmatprep.subr.bf16.mxu0 %v1368
    %1905 = vmatpush1.bf16.msra.mxu0 %v1367
    %1906 = vmatprep.subr.bf16.mxu0 %v1364
    %1907 = vmatpush1.bf16.msra.mxu0 %v1363
    %1908 = vmatprep.subr.bf16.mxu0 %v1360
    %1909 = vmatpush1.bf16.msra.mxu0 %v1359
    %1910 = vmatprep.subr.bf16.mxu0 %v1356
    %1911 = vmatpush1.bf16.msra.mxu0 %v1355
    %1912 = vmatprep.subr.bf16.mxu0 %v1352
    %1913 = vmatpush1.bf16.msra.mxu0 %v1351
    %1914 = vmatprep.subr.bf16.mxu0 %v1348
    %1915 = vmatpush1.bf16.msra.mxu0 %v1347
    %1916 = vmatprep.subr.bf16.mxu0 %v1408
    %1917 = vmatpush2.bf16.msra.mxu0 %v1407
    %1918 = vmatprep.subr.bf16.mxu0 %v1404
    %1919 = vmatpush2.bf16.msra.mxu0 %v1403
    %1920 = vmatprep.subr.bf16.mxu0 %v1400
    %1921 = vmatpush2.bf16.msra.mxu0 %v1399
    %1922 = vmatprep.subr.bf16.mxu0 %v1396
    %1923 = vmatpush2.bf16.msra.mxu0 %v1395
    %1924 = vmatprep.subr.bf16.mxu0 %v1392
    %1925 = vmatpush2.bf16.msra.mxu0 %v1391
    %1926 = vmatprep.subr.bf16.mxu0 %v1388
    %1927 = vmatpush2.bf16.msra.mxu0 %v1387
    %1928 = vmatprep.subr.bf16.mxu0 %v1384
    %1929 = vmatpush2.bf16.msra.mxu0 %v1383
    %1930 = vmatprep.subr.bf16.mxu0 %v1380
    %1931 = vmatpush2.bf16.msra.mxu0 %v1379
    %1932 = vmatprep.mubr.bf16.mxu0 %v404
    %1933 = vmatmul.mubr.bf16.gmra.mxu0 %v403
    %v1934 = vpop.f32.mrf.mxu0
    %v1935 = vadd.f32 %v1894, %v1934
    %v1936 = vpop.f32.mrf.mxu0
    %v1937 = vadd.f32 %v1896, %v1936
    %v1938 = vpop.f32.mrf.mxu0
    %v1939 = vpop.f32.mrf.mxu0
    %1940 = vdwg.mxu0
    %1941 = vmatprep.subr.bf16.mxu0 %v1440
    %1942 = vmatpush1.bf16.msra.mxu0 %v1439
    %1943 = vmatprep.subr.bf16.mxu0 %v1436
    %1944 = vmatpush1.bf16.msra.mxu0 %v1435
    %1945 = vmatprep.subr.bf16.mxu0 %v1432
    %1946 = vmatpush1.bf16.msra.mxu0 %v1431
    %1947 = vmatprep.subr.bf16.mxu0 %v1428
    %1948 = vmatpush1.bf16.msra.mxu0 %v1427
    %1949 = vmatprep.subr.bf16.mxu0 %v1424
    %1950 = vmatpush1.bf16.msra.mxu0 %v1423
    %1951 = vmatprep.subr.bf16.mxu0 %v1420
    %1952 = vmatpush1.bf16.msra.mxu0 %v1419
    %1953 = vmatprep.subr.bf16.mxu0 %v1416
    %1954 = vmatpush1.bf16.msra.mxu0 %v1415
    %1955 = vmatprep.subr.bf16.mxu0 %v1412
    %1956 = vmatpush1.bf16.msra.mxu0 %v1411
    %1957 = vmatprep.subr.bf16.mxu0 %v1472
    %1958 = vmatpush2.bf16.msra.mxu0 %v1471
    %1959 = vmatprep.subr.bf16.mxu0 %v1468
    %1960 = vmatpush2.bf16.msra.mxu0 %v1467
    %1961 = vmatprep.subr.bf16.mxu0 %v1464
    %1962 = vmatpush2.bf16.msra.mxu0 %v1463
    %1963 = vmatprep.subr.bf16.mxu0 %v1460
    %1964 = vmatpush2.bf16.msra.mxu0 %v1459
    %1965 = vmatprep.subr.bf16.mxu0 %v1456
    %1966 = vmatpush2.bf16.msra.mxu0 %v1455
    %1967 = vmatprep.subr.bf16.mxu0 %v1452
    %1968 = vmatpush2.bf16.msra.mxu0 %v1451
    %1969 = vmatprep.subr.bf16.mxu0 %v1448
    %1970 = vmatpush2.bf16.msra.mxu0 %v1447
    %1971 = vmatprep.subr.bf16.mxu0 %v1444
    %1972 = vmatpush2.bf16.msra.mxu0 %v1443
    %1973 = vmatprep.mubr.bf16.mxu0 %v406
    %1974 = vmatmul.mubr.bf16.gmra.mxu0 %v405
    %v1975 = vpop.f32.mrf.mxu0
    %v1976 = vadd.f32 %v1935, %v1975
    %v1977 = vpop.f32.mrf.mxu0
    %v1978 = vadd.f32 %v1937, %v1977
    %v1979 = vpop.f32.mrf.mxu0
    %v1980 = vpop.f32.mrf.mxu0
    %1981 = vdwg.mxu0
    %1982 = vmatprep.subr.bf16.mxu0 %v1504
    %1983 = vmatpush1.bf16.msra.mxu0 %v1503
    %1984 = vmatprep.subr.bf16.mxu0 %v1500
    %1985 = vmatpush1.bf16.msra.mxu0 %v1499
    %1986 = vmatprep.subr.bf16.mxu0 %v1496
    %1987 = vmatpush1.bf16.msra.mxu0 %v1495
    %1988 = vmatprep.subr.bf16.mxu0 %v1492
    %1989 = vmatpush1.bf16.msra.mxu0 %v1491
    %1990 = vmatprep.subr.bf16.mxu0 %v1488
    %1991 = vmatpush1.bf16.msra.mxu0 %v1487
    %1992 = vmatprep.subr.bf16.mxu0 %v1484
    %1993 = vmatpush1.bf16.msra.mxu0 %v1483
    %1994 = vmatprep.subr.bf16.mxu0 %v1480
    %1995 = vmatpush1.bf16.msra.mxu0 %v1479
    %1996 = vmatprep.subr.bf16.mxu0 %v1476
    %1997 = vmatpush1.bf16.msra.mxu0 %v1475
    %1998 = vmatprep.subr.bf16.mxu0 %v1536
    %1999 = vmatpush2.bf16.msra.mxu0 %v1535
    %2000 = vmatprep.subr.bf16.mxu0 %v1532
    %2001 = vmatpush2.bf16.msra.mxu0 %v1531
    %2002 = vmatprep.subr.bf16.mxu0 %v1528
    %2003 = vmatpush2.bf16.msra.mxu0 %v1527
    %2004 = vmatprep.subr.bf16.mxu0 %v1524
    %2005 = vmatpush2.bf16.msra.mxu0 %v1523
    %2006 = vmatprep.subr.bf16.mxu0 %v1520
    %2007 = vmatpush2.bf16.msra.mxu0 %v1519
    %2008 = vmatprep.subr.bf16.mxu0 %v1516
    %2009 = vmatpush2.bf16.msra.mxu0 %v1515
    %2010 = vmatprep.subr.bf16.mxu0 %v1512
    %2011 = vmatpush2.bf16.msra.mxu0 %v1511
    %2012 = vmatprep.subr.bf16.mxu0 %v1508
    %2013 = vmatpush2.bf16.msra.mxu0 %v1507
    %2014 = vmatprep.mubr.bf16.mxu0 %v408
    %2015 = vmatmul.mubr.bf16.gmra.mxu0 %v407
    %v2016 = vpop.f32.mrf.mxu0
    %v2017 = vadd.f32 %v1976, %v2016
    %v2018 = vpop.f32.mrf.mxu0
    %v2019 = vadd.f32 %v1978, %v2018
    %v2020 = vpop.f32.mrf.mxu0
    %v2021 = vpop.f32.mrf.mxu0
    %2022 = vdwg.mxu0
    %2023 = vmatprep.subr.bf16.mxu0 %v1568
    %2024 = vmatpush1.bf16.msra.mxu0 %v1567
    %2025 = vmatprep.subr.bf16.mxu0 %v1564
    %2026 = vmatpush1.bf16.msra.mxu0 %v1563
    %2027 = vmatprep.subr.bf16.mxu0 %v1560
    %2028 = vmatpush1.bf16.msra.mxu0 %v1559
    %2029 = vmatprep.subr.bf16.mxu0 %v1556
    %2030 = vmatpush1.bf16.msra.mxu0 %v1555
    %2031 = vmatprep.subr.bf16.mxu0 %v1552
    %2032 = vmatpush1.bf16.msra.mxu0 %v1551
    %2033 = vmatprep.subr.bf16.mxu0 %v1548
    %2034 = vmatpush1.bf16.msra.mxu0 %v1547
    %2035 = vmatprep.subr.bf16.mxu0 %v1544
    %2036 = vmatpush1.bf16.msra.mxu0 %v1543
    %2037 = vmatprep.subr.bf16.mxu0 %v1540
    %2038 = vmatpush1.bf16.msra.mxu0 %v1539
    %2039 = vmatprep.subr.bf16.mxu0 0
    %2040 = vmatpush2.bf16.msra.mxu0 0
    %2041 = vmatprep.subr.bf16.mxu0 0
    %2042 = vmatpush2.bf16.msra.mxu0 0
    %2043 = vmatprep.subr.bf16.mxu0 0
    %2044 = vmatpush2.bf16.msra.mxu0 0
    %2045 = vmatprep.subr.bf16.mxu0 0
    %2046 = vmatpush2.bf16.msra.mxu0 0
    %2047 = vmatprep.subr.bf16.mxu0 0
    %2048 = vmatpush2.bf16.msra.mxu0 0
    %2049 = vmatprep.subr.bf16.mxu0 0
    %2050 = vmatpush2.bf16.msra.mxu0 0
    %2051 = vmatprep.subr.bf16.mxu0 0
    %2052 = vmatpush2.bf16.msra.mxu0 0
    %2053 = vmatprep.subr.bf16.mxu0 0
    %2054 = vmatpush2.bf16.msra.mxu0 0
    %2055 = vmatprep.mubr.bf16.mxu0 0
    %2056 = vmatmul.mubr.bf16.gmra.mxu0 %v409
    %v2057 = vpop.f32.mrf.mxu0
    %v2058 = vadd.f32 %v2017, %v2057
    %v2059 = vpop.f32.mrf.mxu0
    %v2060 = vadd.f32 %v2019, %v2059
    %v2061 = vpop.f32.mrf.mxu0
    %v2062 = vpop.f32.mrf.mxu0
    %2063 = vdwg.mxu0
    %2064 = vmatprep.subr.bf16.mxu0 %v1314
    %2065 = vmatpush1.bf16.msra.mxu0 %v1313
    %2066 = vmatprep.subr.bf16.mxu0 %v1310
    %2067 = vmatpush1.bf16.msra.mxu0 %v1309
    %2068 = vmatprep.subr.bf16.mxu0 %v1306
    %2069 = vmatpush1.bf16.msra.mxu0 %v1305
    %2070 = vmatprep.subr.bf16.mxu0 %v1302
    %2071 = vmatpush1.bf16.msra.mxu0 %v1301
    %2072 = vmatprep.subr.bf16.mxu0 %v1298
    %2073 = vmatpush1.bf16.msra.mxu0 %v1297
    %2074 = vmatprep.subr.bf16.mxu0 %v1294
    %2075 = vmatpush1.bf16.msra.mxu0 %v1293
    %2076 = vmatprep.subr.bf16.mxu0 %v1290
    %2077 = vmatpush1.bf16.msra.mxu0 %v1289
    %2078 = vmatprep.subr.bf16.mxu0 %v1286
    %2079 = vmatpush1.bf16.msra.mxu0 %v1285
    %2080 = vmatprep.subr.bf16.mxu0 %v1346
    %2081 = vmatpush2.bf16.msra.mxu0 %v1345
    %2082 = vmatprep.subr.bf16.mxu0 %v1342
    %2083 = vmatpush2.bf16.msra.mxu0 %v1341
    %2084 = vmatprep.subr.bf16.mxu0 %v1338
    %2085 = vmatpush2.bf16.msra.mxu0 %v1337
    %2086 = vmatprep.subr.bf16.mxu0 %v1334
    %2087 = vmatpush2.bf16.msra.mxu0 %v1333
    %2088 = vmatprep.subr.bf16.mxu0 %v1330
    %2089 = vmatpush2.bf16.msra.mxu0 %v1329
    %2090 = vmatprep.subr.bf16.mxu0 %v1326
    %2091 = vmatpush2.bf16.msra.mxu0 %v1325
    %2092 = vmatprep.subr.bf16.mxu0 %v1322
    %2093 = vmatpush2.bf16.msra.mxu0 %v1321
    %2094 = vmatprep.subr.bf16.mxu0 %v1318
    %2095 = vmatpush2.bf16.msra.mxu0 %v1317
    %2096 = vmatprep.mubr.bf16.mxu0 %v402
    %2097 = vmatmul.mubr.bf16.gmra.mxu0 %v401
    %v2098 = vpop.f32.mrf.mxu0
    %v2099 = vadd.f32 %v378, %v2098
    %v2100 = vpop.f32.mrf.mxu0
    %v2101 = vadd.f32 %v382, %v2100
    %v2102 = vpop.f32.mrf.mxu0
    %v2103 = vpop.f32.mrf.mxu0
    %2104 = vdwg.mxu0
    %2105 = vmatprep.subr.bf16.mxu0 %v1378
    %2106 = vmatpush1.bf16.msra.mxu0 %v1377
    %2107 = vmatprep.subr.bf16.mxu0 %v1374
    %2108 = vmatpush1.bf16.msra.mxu0 %v1373
    %2109 = vmatprep.subr.bf16.mxu0 %v1370
    %2110 = vmatpush1.bf16.msra.mxu0 %v1369
    %2111 = vmatprep.subr.bf16.mxu0 %v1366
    %2112 = vmatpush1.bf16.msra.mxu0 %v1365
    %2113 = vmatprep.subr.bf16.mxu0 %v1362
    %2114 = vmatpush1.bf16.msra.mxu0 %v1361
    %2115 = vmatprep.subr.bf16.mxu0 %v1358
    %2116 = vmatpush1.bf16.msra.mxu0 %v1357
    %2117 = vmatprep.subr.bf16.mxu0 %v1354
    %2118 = vmatpush1.bf16.msra.mxu0 %v1353
    %2119 = vmatprep.subr.bf16.mxu0 %v1350
    %2120 = vmatpush1.bf16.msra.mxu0 %v1349
    %2121 = vmatprep.subr.bf16.mxu0 %v1410
    %2122 = vmatpush2.bf16.msra.mxu0 %v1409
    %2123 = vmatprep.subr.bf16.mxu0 %v1406
    %2124 = vmatpush2.bf16.msra.mxu0 %v1405
    %2125 = vmatprep.subr.bf16.mxu0 %v1402
    %2126 = vmatpush2.bf16.msra.mxu0 %v1401
    %2127 = vmatprep.subr.bf16.mxu0 %v1398
    %2128 = vmatpush2.bf16.msra.mxu0 %v1397
    %2129 = vmatprep.subr.bf16.mxu0 %v1394
    %2130 = vmatpush2.bf16.msra.mxu0 %v1393
    %2131 = vmatprep.subr.bf16.mxu0 %v1390
    %2132 = vmatpush2.bf16.msra.mxu0 %v1389
    %2133 = vmatprep.subr.bf16.mxu0 %v1386
    %2134 = vmatpush2.bf16.msra.mxu0 %v1385
    %2135 = vmatprep.subr.bf16.mxu0 %v1382
    %2136 = vmatpush2.bf16.msra.mxu0 %v1381
    %2137 = vmatprep.mubr.bf16.mxu0 %v404
    %2138 = vmatmul.mubr.bf16.gmra.mxu0 %v403
    %v2139 = vpop.f32.mrf.mxu0
    %v2140 = vadd.f32 %v2099, %v2139
    %v2141 = vpop.f32.mrf.mxu0
    %v2142 = vadd.f32 %v2101, %v2141
    %v2143 = vpop.f32.mrf.mxu0
    %v2144 = vpop.f32.mrf.mxu0
    %2145 = vdwg.mxu0
    %2146 = vmatprep.subr.bf16.mxu0 %v1442
    %2147 = vmatpush1.bf16.msra.mxu0 %v1441
    %2148 = vmatprep.subr.bf16.mxu0 %v1438
    %2149 = vmatpush1.bf16.msra.mxu0 %v1437
    %2150 = vmatprep.subr.bf16.mxu0 %v1434
    %2151 = vmatpush1.bf16.msra.mxu0 %v1433
    %2152 = vmatprep.subr.bf16.mxu0 %v1430
    %2153 = vmatpush1.bf16.msra.mxu0 %v1429
    %2154 = vmatprep.subr.bf16.mxu0 %v1426
    %2155 = vmatpush1.bf16.msra.mxu0 %v1425
    %2156 = vmatprep.subr.bf16.mxu0 %v1422
    %2157 = vmatpush1.bf16.msra.mxu0 %v1421
    %2158 = vmatprep.subr.bf16.mxu0 %v1418
    %2159 = vmatpush1.bf16.msra.mxu0 %v1417
    %2160 = vmatprep.subr.bf16.mxu0 %v1414
    %2161 = vmatpush1.bf16.msra.mxu0 %v1413
    %2162 = vmatprep.subr.bf16.mxu0 %v1474
    %2163 = vmatpush2.bf16.msra.mxu0 %v1473
    %2164 = vmatprep.subr.bf16.mxu0 %v1470
    %2165 = vmatpush2.bf16.msra.mxu0 %v1469
    %2166 = vmatprep.subr.bf16.mxu0 %v1466
    %2167 = vmatpush2.bf16.msra.mxu0 %v1465
    %2168 = vmatprep.subr.bf16.mxu0 %v1462
    %2169 = vmatpush2.bf16.msra.mxu0 %v1461
    %2170 = vmatprep.subr.bf16.mxu0 %v1458
    %2171 = vmatpush2.bf16.msra.mxu0 %v1457
    %2172 = vmatprep.subr.bf16.mxu0 %v1454
    %2173 = vmatpush2.bf16.msra.mxu0 %v1453
    %2174 = vmatprep.subr.bf16.mxu0 %v1450
    %2175 = vmatpush2.bf16.msra.mxu0 %v1449
    %2176 = vmatprep.subr.bf16.mxu0 %v1446
    %2177 = vmatpush2.bf16.msra.mxu0 %v1445
    %2178 = vmatprep.mubr.bf16.mxu0 %v406
    %2179 = vmatmul.mubr.bf16.gmra.mxu0 %v405
    %v2180 = vpop.f32.mrf.mxu0
    %v2181 = vadd.f32 %v2140, %v2180
    %v2182 = vpop.f32.mrf.mxu0
    %v2183 = vadd.f32 %v2142, %v2182
    %v2184 = vpop.f32.mrf.mxu0
    %v2185 = vpop.f32.mrf.mxu0
    %2186 = vdwg.mxu0
    %2187 = vmatprep.subr.bf16.mxu0 %v1506
    %2188 = vmatpush1.bf16.msra.mxu0 %v1505
    %2189 = vmatprep.subr.bf16.mxu0 %v1502
    %2190 = vmatpush1.bf16.msra.mxu0 %v1501
    %2191 = vmatprep.subr.bf16.mxu0 %v1498
    %2192 = vmatpush1.bf16.msra.mxu0 %v1497
    %2193 = vmatprep.subr.bf16.mxu0 %v1494
    %2194 = vmatpush1.bf16.msra.mxu0 %v1493
    %2195 = vmatprep.subr.bf16.mxu0 %v1490
    %2196 = vmatpush1.bf16.msra.mxu0 %v1489
    %2197 = vmatprep.subr.bf16.mxu0 %v1486
    %2198 = vmatpush1.bf16.msra.mxu0 %v1485
    %2199 = vmatprep.subr.bf16.mxu0 %v1482
    %2200 = vmatpush1.bf16.msra.mxu0 %v1481
    %2201 = vmatprep.subr.bf16.mxu0 %v1478
    %2202 = vmatpush1.bf16.msra.mxu0 %v1477
    %2203 = vmatprep.subr.bf16.mxu0 %v1538
    %2204 = vmatpush2.bf16.msra.mxu0 %v1537
    %2205 = vmatprep.subr.bf16.mxu0 %v1534
    %2206 = vmatpush2.bf16.msra.mxu0 %v1533
    %2207 = vmatprep.subr.bf16.mxu0 %v1530
    %2208 = vmatpush2.bf16.msra.mxu0 %v1529
    %2209 = vmatprep.subr.bf16.mxu0 %v1526
    %2210 = vmatpush2.bf16.msra.mxu0 %v1525
    %2211 = vmatprep.subr.bf16.mxu0 %v1522
    %2212 = vmatpush2.bf16.msra.mxu0 %v1521
    %2213 = vmatprep.subr.bf16.mxu0 %v1518
    %2214 = vmatpush2.bf16.msra.mxu0 %v1517
    %2215 = vmatprep.subr.bf16.mxu0 %v1514
    %2216 = vmatpush2.bf16.msra.mxu0 %v1513
    %2217 = vmatprep.subr.bf16.mxu0 %v1510
    %2218 = vmatpush2.bf16.msra.mxu0 %v1509
    %2219 = vmatprep.mubr.bf16.mxu0 %v408
    %2220 = vmatmul.mubr.bf16.gmra.mxu0 %v407
    %v2221 = vpop.f32.mrf.mxu0
    %v2222 = vadd.f32 %v2181, %v2221
    %v2223 = vpop.f32.mrf.mxu0
    %v2224 = vadd.f32 %v2183, %v2223
    %v2225 = vpop.f32.mrf.mxu0
    %v2226 = vpop.f32.mrf.mxu0
    %2227 = vdwg.mxu0
    %2228 = vmatprep.subr.bf16.mxu0 %v1570
    %2229 = vmatpush1.bf16.msra.mxu0 %v1569
    %2230 = vmatprep.subr.bf16.mxu0 %v1566
    %2231 = vmatpush1.bf16.msra.mxu0 %v1565
    %2232 = vmatprep.subr.bf16.mxu0 %v1562
    %2233 = vmatpush1.bf16.msra.mxu0 %v1561
    %2234 = vmatprep.subr.bf16.mxu0 %v1558
    %2235 = vmatpush1.bf16.msra.mxu0 %v1557
    %2236 = vmatprep.subr.bf16.mxu0 %v1554
    %2237 = vmatpush1.bf16.msra.mxu0 %v1553
    %2238 = vmatprep.subr.bf16.mxu0 %v1550
    %2239 = vmatpush1.bf16.msra.mxu0 %v1549
    %2240 = vmatprep.subr.bf16.mxu0 %v1546
    %2241 = vmatpush1.bf16.msra.mxu0 %v1545
    %2242 = vmatprep.subr.bf16.mxu0 %v1542
    %2243 = vmatpush1.bf16.msra.mxu0 %v1541
    %2244 = vmatprep.subr.bf16.mxu0 0
    %2245 = vmatpush2.bf16.msra.mxu0 0
    %2246 = vmatprep.subr.bf16.mxu0 0
    %2247 = vmatpush2.bf16.msra.mxu0 0
    %2248 = vmatprep.subr.bf16.mxu0 0
    %2249 = vmatpush2.bf16.msra.mxu0 0
    %2250 = vmatprep.subr.bf16.mxu0 0
    %2251 = vmatpush2.bf16.msra.mxu0 0
    %2252 = vmatprep.subr.bf16.mxu0 0
    %2253 = vmatpush2.bf16.msra.mxu0 0
    %2254 = vmatprep.subr.bf16.mxu0 0
    %2255 = vmatpush2.bf16.msra.mxu0 0
    %2256 = vmatprep.subr.bf16.mxu0 0
    %2257 = vmatpush2.bf16.msra.mxu0 0
    %2258 = vmatprep.subr.bf16.mxu0 0
    %2259 = vmatpush2.bf16.msra.mxu0 0
    %2260 = vmatprep.mubr.bf16.mxu0 0
    %2261 = vmatmul.mubr.bf16.gmra.mxu0 %v409
    %v2262 = vpop.f32.mrf.mxu0
    %v2263 = vadd.f32 %v2222, %v2262
    %v2264 = vpop.f32.mrf.mxu0
    %v2265 = vadd.f32 %v2224, %v2264
    %v2266 = vpop.f32.mrf.mxu0
    %v2267 = vpop.f32.mrf.mxu0
    %2268 = vdwg.mxu0
    %v2269 = vmax.f32 %v2058, 0.0
    %v2270 = vmax.f32 %v2060, 0.0
    %v2271 = vmax.f32 %v2263, 0.0
    %v2272 = vmax.f32 %v2265, 0.0
    %v2273 = vpack.c.bf16 %v2269, %v2269
    %v2274 = vpack.c.bf16 %v2270, %v2270
    %v2275 = vpack.c.bf16 %v2271, %v2271
    %v2276 = vpack.c.bf16 %v2272, %v2272
    %v2277 = vld [vmem:[#allocation6] sm:$0xf]
    %v2278 = vld [vmem:[#allocation6 + $0x4] sm:$0xf]
    %v2279 = vld [vmem:[#allocation6 + $0x8] sm:$0xf]
    %v2280 = vld [vmem:[#allocation6 + $0xc] sm:$0xf]
    %v2281 = vld [vmem:[#allocation6 + $0x10] sm:$0xf]
    %v2282 = vld [vmem:[#allocation6 + $0x14] sm:$0xf]
    %v2283 = vld [vmem:[#allocation6 + $0x18] sm:$0xf]
    %v2284 = vld [vmem:[#allocation6 + $0x1c] sm:$0xf]
    %v2285 = vld [vmem:[#allocation6 + $0x20] sm:$0xf]
    %v2286 = vld [vmem:[#allocation6 + $0x24] sm:$0xf]
    %v2287 = vld [vmem:[#allocation6 + $0x28] sm:$0xf]
    %v2288 = vld [vmem:[#allocation6 + $0x2c] sm:$0xf]
    %v2289 = vld [vmem:[#allocation6 + $0x30] sm:$0xf]
    %v2290 = vld [vmem:[#allocation6 + $0x34] sm:$0xf]
    %v2291 = vld [vmem:[#allocation6 + $0x38] sm:$0xf]
    %v2292 = vld [vmem:[#allocation6 + $0x3c] sm:$0xf]
    %v2293 = vld [vmem:[#allocation6 + $0x40] sm:$0xf]
    %v2294 = vld [vmem:[#allocation6 + $0x44] sm:$0xf]
    %v2295 = vld [vmem:[#allocation6 + $0x48] sm:$0xf]
    %v2296 = vld [vmem:[#allocation6 + $0x4c] sm:$0xf]
    %v2297 = vld [vmem:[#allocation6 + $0x50] sm:$0xf]
    %v2298 = vld [vmem:[#allocation6 + $0x54] sm:$0xf]
    %v2299 = vld [vmem:[#allocation6 + $0x58] sm:$0xf]
    %v2300 = vld [vmem:[#allocation6 + $0x5c] sm:$0xf]
    %v2301 = vld [vmem:[#allocation6 + $0x60] sm:$0xf]
    %v2302 = vld [vmem:[#allocation6 + $0x64] sm:$0xf]
    %v2303 = vld [vmem:[#allocation6 + $0x68] sm:$0xf]
    %v2304 = vld [vmem:[#allocation6 + $0x6c] sm:$0xf]
    %v2305 = vld [vmem:[#allocation6 + $0x70] sm:$0xf]
    %v2306 = vld [vmem:[#allocation6 + $0x74] sm:$0xf]
    %v2307 = vld [vmem:[#allocation6 + $0x78] sm:$0xf]
    %v2308 = vld [vmem:[#allocation6 + $0x7c] sm:$0xf]
    %v2309 = vld [vmem:[#allocation6 + $0x80] sm:$0xf]
    %v2310 = vld [vmem:[#allocation6 + $0x84] sm:$0xf]
    %v2311 = vld [vmem:[#allocation6 + $0x88] sm:$0xf]
    %v2312 = vld [vmem:[#allocation6 + $0x8c] sm:$0xf]
    %v2313 = vld [vmem:[#allocation6 + $0x90] sm:$0xf]
    %v2314 = vld [vmem:[#allocation6 + $0x94] sm:$0xf]
    %v2315 = vld [vmem:[#allocation6 + $0x98] sm:$0xf]
    %v2316 = vld [vmem:[#allocation6 + $0x9c] sm:$0xf]
    %v2317 = vld [vmem:[#allocation6 + $0xa0] sm:$0xf]
    %v2318 = vld [vmem:[#allocation6 + $0xa4] sm:$0xf]
    %v2319 = vld [vmem:[#allocation6 + $0xa8] sm:$0xf]
    %v2320 = vld [vmem:[#allocation6 + $0xac] sm:$0xf]
    %v2321 = vld [vmem:[#allocation6 + $0xb0] sm:$0xf]
    %v2322 = vld [vmem:[#allocation6 + $0xb4] sm:$0xf]
    %v2323 = vld [vmem:[#allocation6 + $0xb8] sm:$0xf]
    %v2324 = vld [vmem:[#allocation6 + $0xbc] sm:$0xf]
    %v2325 = vld [vmem:[#allocation6 + $0xc0] sm:$0xf]
    %v2326 = vld [vmem:[#allocation6 + $0xc4] sm:$0xf]
    %v2327 = vld [vmem:[#allocation6 + $0xc8] sm:$0xf]
    %v2328 = vld [vmem:[#allocation6 + $0xcc] sm:$0xf]
    %v2329 = vld [vmem:[#allocation6 + $0xd0] sm:$0xf]
    %v2330 = vld [vmem:[#allocation6 + $0xd4] sm:$0xf]
    %v2331 = vld [vmem:[#allocation6 + $0xd8] sm:$0xf]
    %v2332 = vld [vmem:[#allocation6 + $0xdc] sm:$0xf]
    %v2333 = vld [vmem:[#allocation6 + $0xe0] sm:$0xf]
    %v2334 = vld [vmem:[#allocation6 + $0xe4] sm:$0xf]
    %v2335 = vld [vmem:[#allocation6 + $0xe8] sm:$0xf]
    %v2336 = vld [vmem:[#allocation6 + $0xec] sm:$0xf]
    %v2337 = vld [vmem:[#allocation6 + $0xf0] sm:$0xf]
    %v2338 = vld [vmem:[#allocation6 + $0xf4] sm:$0xf]
    %v2339 = vld [vmem:[#allocation6 + $0xf8] sm:$0xf]
    %v2340 = vld [vmem:[#allocation6 + $0xfc] sm:$0xf]
    %v2341 = vld [vmem:[#allocation7] sm:$0x1]
    %v2343 = vlaneseq
    %v2344 = vshrl.u32 %v2343, 7
    %v2345 = vsub.s32 0, %v2344
    %v2346 = vrot.slane %v2341, %v2345
    %v2412 = vunpack.c.l.b16 %v2277
    %v2413 = vunpack.c.l.b16 %v2278
    %v2414 = vunpack.c.l.b16 %v2279
    %v2415 = vunpack.c.l.b16 %v2280
    %v2416 = vunpack.c.l.b16 %v2281
    %v2417 = vunpack.c.l.b16 %v2282
    %v2418 = vunpack.c.l.b16 %v2283
    %v2419 = vunpack.c.l.b16 %v2284
    %v2420 = vunpack.c.l.b16 %v2285
    %v2421 = vunpack.c.l.b16 %v2286
    %v2422 = vunpack.c.l.b16 %v2287
    %v2423 = vunpack.c.l.b16 %v2288
    %v2424 = vunpack.c.l.b16 %v2289
    %v2425 = vunpack.c.l.b16 %v2290
    %v2426 = vunpack.c.l.b16 %v2291
    %v2427 = vunpack.c.l.b16 %v2292
    %v2428 = vunpack.c.l.b16 %v2293
    %v2429 = vunpack.c.l.b16 %v2294
    %v2430 = vunpack.c.l.b16 %v2295
    %v2431 = vunpack.c.l.b16 %v2296
    %v2432 = vunpack.c.l.b16 %v2297
    %v2433 = vunpack.c.l.b16 %v2298
    %v2434 = vunpack.c.l.b16 %v2299
    %v2435 = vunpack.c.l.b16 %v2300
    %v2436 = vunpack.c.l.b16 %v2301
    %v2437 = vunpack.c.l.b16 %v2302
    %v2438 = vunpack.c.l.b16 %v2303
    %v2439 = vunpack.c.l.b16 %v2304
    %v2440 = vunpack.c.l.b16 %v2305
    %v2441 = vunpack.c.l.b16 %v2306
    %v2442 = vunpack.c.l.b16 %v2307
    %v2443 = vunpack.c.l.b16 %v2308
    %v2444 = vunpack.c.l.b16 %v2309
    %v2445 = vunpack.c.l.b16 %v2310
    %v2446 = vunpack.c.l.b16 %v2311
    %v2447 = vunpack.c.l.b16 %v2312
    %v2448 = vunpack.c.l.b16 %v2313
    %v2449 = vunpack.c.l.b16 %v2314
    %v2450 = vunpack.c.l.b16 %v2315
    %v2451 = vunpack.c.l.b16 %v2316
    %v2452 = vunpack.c.l.b16 %v2317
    %v2453 = vunpack.c.l.b16 %v2318
    %v2454 = vunpack.c.l.b16 %v2319
    %v2455 = vunpack.c.l.b16 %v2320
    %v2456 = vunpack.c.l.b16 %v2321
    %v2457 = vunpack.c.l.b16 %v2322
    %v2458 = vunpack.c.l.b16 %v2323
    %v2459 = vunpack.c.l.b16 %v2324
    %v2460 = vunpack.c.l.b16 %v2325
    %v2461 = vunpack.c.l.b16 %v2326
    %v2462 = vunpack.c.l.b16 %v2327
    %v2463 = vunpack.c.l.b16 %v2328
    %v2464 = vunpack.c.l.b16 %v2329
    %v2465 = vunpack.c.l.b16 %v2330
    %v2466 = vunpack.c.l.b16 %v2331
    %v2467 = vunpack.c.l.b16 %v2332
    %v2468 = vunpack.c.l.b16 %v2333
    %v2469 = vunpack.c.l.b16 %v2334
    %v2470 = vunpack.c.l.b16 %v2335
    %v2471 = vunpack.c.l.b16 %v2336
    %v2472 = vunpack.c.l.b16 %v2337
    %v2473 = vunpack.c.l.b16 %v2338
    %v2474 = vunpack.c.l.b16 %v2339
    %v2475 = vunpack.c.l.b16 %v2340
    %v2476 = vpack.c.b16 %v2413, %v2412
    %v2477 = vpack.c.b16 %v2415, %v2414
    %v2478 = vpack.c.b16 %v2417, %v2416
    %v2479 = vpack.c.b16 %v2419, %v2418
    %v2480 = vpack.c.b16 %v2421, %v2420
    %v2481 = vpack.c.b16 %v2423, %v2422
    %v2482 = vpack.c.b16 %v2425, %v2424
    %v2483 = vpack.c.b16 %v2427, %v2426
    %v2484 = vpack.c.b16 %v2429, %v2428
    %v2485 = vpack.c.b16 %v2431, %v2430
    %v2486 = vpack.c.b16 %v2433, %v2432
    %v2487 = vpack.c.b16 %v2435, %v2434
    %v2488 = vpack.c.b16 %v2437, %v2436
    %v2489 = vpack.c.b16 %v2439, %v2438
    %v2490 = vpack.c.b16 %v2441, %v2440
    %v2491 = vpack.c.b16 %v2443, %v2442
    %v2492 = vpack.c.b16 %v2445, %v2444
    %v2493 = vpack.c.b16 %v2447, %v2446
    %v2494 = vpack.c.b16 %v2449, %v2448
    %v2495 = vpack.c.b16 %v2451, %v2450
    %v2496 = vpack.c.b16 %v2453, %v2452
    %v2497 = vpack.c.b16 %v2455, %v2454
    %v2498 = vpack.c.b16 %v2457, %v2456
    %v2499 = vpack.c.b16 %v2459, %v2458
    %v2500 = vpack.c.b16 %v2461, %v2460
    %v2501 = vpack.c.b16 %v2463, %v2462
    %v2502 = vpack.c.b16 %v2465, %v2464
    %v2503 = vpack.c.b16 %v2467, %v2466
    %v2504 = vpack.c.b16 %v2469, %v2468
    %v2505 = vpack.c.b16 %v2471, %v2470
    %v2506 = vpack.c.b16 %v2473, %v2472
    %v2507 = vpack.c.b16 %v2475, %v2474
    %2540 = vmatprep.subr.bf16.mxu0 0
    %2541 = vmatpush1.bf16.msra.mxu0 %v2483
    %2542 = vmatprep.subr.bf16.mxu0 0
    %2543 = vmatpush1.bf16.msra.mxu0 %v2482
    %2544 = vmatprep.subr.bf16.mxu0 0
    %2545 = vmatpush1.bf16.msra.mxu0 %v2481
    %2546 = vmatprep.subr.bf16.mxu0 0
    %2547 = vmatpush1.bf16.msra.mxu0 %v2480
    %2548 = vmatprep.subr.bf16.mxu0 0
    %2549 = vmatpush1.bf16.msra.mxu0 %v2479
    %2550 = vmatprep.subr.bf16.mxu0 0
    %2551 = vmatpush1.bf16.msra.mxu0 %v2478
    %2552 = vmatprep.subr.bf16.mxu0 0
    %2553 = vmatpush1.bf16.msra.mxu0 %v2477
    %2554 = vmatprep.subr.bf16.mxu0 0
    %2555 = vmatpush1.bf16.msra.mxu0 %v2476
    %2556 = vmatprep.subr.bf16.mxu0 0
    %2557 = vmatpush2.bf16.msra.mxu0 %v2491
    %2558 = vmatprep.subr.bf16.mxu0 0
    %2559 = vmatpush2.bf16.msra.mxu0 %v2490
    %2560 = vmatprep.subr.bf16.mxu0 0
    %2561 = vmatpush2.bf16.msra.mxu0 %v2489
    %2562 = vmatprep.subr.bf16.mxu0 0
    %2563 = vmatpush2.bf16.msra.mxu0 %v2488
    %2564 = vmatprep.subr.bf16.mxu0 0
    %2565 = vmatpush2.bf16.msra.mxu0 %v2487
    %2566 = vmatprep.subr.bf16.mxu0 0
    %2567 = vmatpush2.bf16.msra.mxu0 %v2486
    %2568 = vmatprep.subr.bf16.mxu0 0
    %2569 = vmatpush2.bf16.msra.mxu0 %v2485
    %2570 = vmatprep.subr.bf16.mxu0 0
    %2571 = vmatpush2.bf16.msra.mxu0 %v2484
    %2572 = vmatprep.mubr.bf16.mxu0 %v2274
    %2573 = vmatmul.mubr.bf16.gmra.mxu0 %v2273
    %v2574 = vpop.f32.mrf.mxu0
    %v2575 = vadd.f32 %v2346, %v2574
    %v2576 = vpop.f32.mrf.mxu0
    %v2577 = vpop.f32.mrf.mxu0
    %v2578 = vpop.f32.mrf.mxu0
    %2579 = vdwg.mxu0
    %2580 = vmatprep.subr.bf16.mxu0 0
    %2581 = vmatpush1.bf16.msra.mxu0 %v2499
    %2582 = vmatprep.subr.bf16.mxu0 0
    %2583 = vmatpush1.bf16.msra.mxu0 %v2498
    %2584 = vmatprep.subr.bf16.mxu0 0
    %2585 = vmatpush1.bf16.msra.mxu0 %v2497
    %2586 = vmatprep.subr.bf16.mxu0 0
    %2587 = vmatpush1.bf16.msra.mxu0 %v2496
    %2588 = vmatprep.subr.bf16.mxu0 0
    %2589 = vmatpush1.bf16.msra.mxu0 %v2495
    %2590 = vmatprep.subr.bf16.mxu0 0
    %2591 = vmatpush1.bf16.msra.mxu0 %v2494
    %2592 = vmatprep.subr.bf16.mxu0 0
    %2593 = vmatpush1.bf16.msra.mxu0 %v2493
    %2594 = vmatprep.subr.bf16.mxu0 0
    %2595 = vmatpush1.bf16.msra.mxu0 %v2492
    %2596 = vmatprep.subr.bf16.mxu0 0
    %2597 = vmatpush2.bf16.msra.mxu0 %v2507
    %2598 = vmatprep.subr.bf16.mxu0 0
    %2599 = vmatpush2.bf16.msra.mxu0 %v2506
    %2600 = vmatprep.subr.bf16.mxu0 0
    %2601 = vmatpush2.bf16.msra.mxu0 %v2505
    %2602 = vmatprep.subr.bf16.mxu0 0
    %2603 = vmatpush2.bf16.msra.mxu0 %v2504
    %2604 = vmatprep.subr.bf16.mxu0 0
    %2605 = vmatpush2.bf16.msra.mxu0 %v2503
    %2606 = vmatprep.subr.bf16.mxu0 0
    %2607 = vmatpush2.bf16.msra.mxu0 %v2502
    %2608 = vmatprep.subr.bf16.mxu0 0
    %2609 = vmatpush2.bf16.msra.mxu0 %v2501
    %2610 = vmatprep.subr.bf16.mxu0 0
    %2611 = vmatpush2.bf16.msra.mxu0 %v2500
    %2612 = vmatprep.mubr.bf16.mxu0 %v2276
    %2613 = vmatmul.mubr.bf16.gmra.mxu0 %v2275
    %v2614 = vpop.f32.mrf.mxu0
    %v2615 = vadd.f32 %v2575, %v2614
    %v2616 = vpop.f32.mrf.mxu0
    %v2617 = vpop.f32.mrf.mxu0
    %v2618 = vpop.f32.mrf.mxu0
    %2619 = vdwg.mxu0
    %2620 = vmax.xlane.f32.xlu0 %v2615
    %v2621 = vpop.xlane.xlu0 %2620
    %v2622 = vsub.f32 %v2615, %v2621
    %v2623 = vmul.f32 %v2622, 1.442695
    %v2624 = vpow.pop %v2623
    %2625 = vadd.xlane.f32.xlu0 %v2624
    %v2626 = vpop.xlane.xlu0 %2625
    %v2627 = vrcp.pop %v2626
    %v2628 = vmul.f32 %v2624, %v2627
    %2629 = vst [vmem:[%s5] sm:$0xff] %v2628
    // Predicated region
    $region38: #{policy_network_forward.1} parent=1 // pred_check
      _
    $region39: #{policy_network_forward.1} parent=1 // pred_check_branch
      %2631 = sbr.rel (0) target = $region41
    $region40: #{policy_network_forward.1} parent=1 // pred_region
      _
    $region41: #{policy_network_forward.1} parent=1 // pred_fallthru
      _
    // Predicated region
    $region42: #{policy_network_forward.1} parent=1 // pred_check
      _
    $region43: #{policy_network_forward.1} parent=1 // pred_check_branch
      %2633 = sbr.rel (0) target = $region45
    $region44: #{policy_network_forward.1} parent=1 // pred_region
      _
    $region45: #{policy_network_forward.1} parent=1 // pred_fallthru
      _
    %2634 = vsyncpa [#allocation3], 1
    %2635 = vsyncpa [#allocation5], 1
    %2636 = vsyncpa [#allocation8], 1

</llo_original>
